<compile_context>
chip_gen: v7x
topology: tpu7x:2x2x1
jax: 0.10.0
libtpu: 0.0.40
codegen_flags: <defaults>
</compile_context>

<pallas_src>
import functools
import math

import jax
import jax.numpy as jnp
from jax.experimental import pallas as pl
from jax.experimental.pallas import tpu as pltpu


# ----------------------------------------------------------------------------
# Fused per-model kernel: one grid step == one RouterEncoding layer
# ----------------------------------------------------------------------------
def _layernorm(z, gamma, beta, eps=1e-5):
    mu = jnp.mean(z, axis=-1, keepdims=True)
    zc = z - mu
    var = jnp.mean(zc * zc, axis=-1, keepdims=True)
    return zc * jax.lax.rsqrt(var + eps) * gamma + beta


def _router_encoding_kernel(n_iter, dims, has_mask, *refs):
    B, S, D, F = dims
    (x_ref, wqkv_ref, w1_ref, b1_ref, w2_ref, b2_ref,
     g0_ref, be0_ref, g1_ref, be1_ref, sc_ref) = refs[:11]
    i = 11
    mask_ref = refs[i] if has_mask else None
    i += int(has_mask)
    o_ref, act_ref = refs[i], refs[i + 1]

    layer = pl.program_id(0)

    # Load the input activation into the resident VMEM scratch once.
    @pl.when(layer == 0)
    def _():
        act_ref[...] = x_ref[...].astype(jnp.float32)

    x3 = act_ref[...]                                   # (B, S, D) f32
    x2 = x3.reshape(B * S, D)

    # ---- SelfRouting (stand-in): fused QKV projection + iterative routing --
    qkv = jnp.dot(x2, wqkv_ref[0], preferred_element_type=jnp.float32)  # (B*S, 3D)
    q = qkv[:, 0 * D:1 * D].reshape(B, S, D)
    k = qkv[:, 1 * D:2 * D].reshape(B, S, D)
    v = qkv[:, 2 * D:3 * D].reshape(B, S, D)
    inv_sqrt_d = 1.0 / math.sqrt(D)

    # Contract over the last dims of both operands -> no materialized k.T.
    logits = jnp.einsum("bqd,bkd->bqk", q, k,
                        preferred_element_type=jnp.float32) * inv_sqrt_d
    if has_mask:
        logits = logits + mask_ref[...]                 # additive mask, folded once

    b = jnp.zeros_like(logits)
    s = jnp.zeros((B, S, D), jnp.float32)
    for it in range(n_iter):                            # small static trip count
        l = logits + b
        mx = jnp.max(l, axis=-1, keepdims=True)
        e = jnp.exp(l - mx)
        c = e * pl.reciprocal(jnp.sum(e, axis=-1, keepdims=True))
        s = jnp.einsum("bqk,bkd->bqd", c, v, preferred_element_type=jnp.float32)
        if it + 1 < n_iter:                             # final b-update is dead
            b = b + jnp.einsum("bqd,bkd->bqk", s, k,
                               preferred_element_type=jnp.float32) * inv_sqrt_d

    # ---- residual + learned scale + LayerNorm0 (dropout = identity) --------
    scale = sc_ref[layer]
    h0 = _layernorm(x2 + scale * s.reshape(B * S, D), g0_ref[0], be0_ref[0])

    # ---- FFN (D -> F -> D) + residual + LayerNorm1 --------------------------
    h = jnp.dot(h0, w1_ref[0], preferred_element_type=jnp.float32) + b1_ref[0]
    h = jnp.maximum(h, 0.0)
    f = jnp.dot(h, w2_ref[0], preferred_element_type=jnp.float32) + b2_ref[0]
    out2 = _layernorm(h0 + f, g1_ref[0], be1_ref[0])

    out3 = out2.reshape(B, S, D)
    act_ref[...] = out3                                 # next layer's input
    o_ref[...] = out3.astype(o_ref.dtype)               # written back to HBM once


# ----------------------------------------------------------------------------
# Wrapper: single pallas_call over the layer axis
# ----------------------------------------------------------------------------
def router_encoding(x, params, mask=None, n_iter=2):
    B, S, D = x.shape
    L, _, F = params["w1"].shape
    has_mask = mask is not None

    in_specs = [
        pl.BlockSpec((B, S, D), lambda l: (0, 0, 0)),          # x (resident)
        pl.BlockSpec((1, D, 3 * D), lambda l: (l, 0, 0)),      # wqkv
        pl.BlockSpec((1, D, F), lambda l: (l, 0, 0)),          # w1
        pl.BlockSpec((1, 1, F), lambda l: (l, 0, 0)),          # b1
        pl.BlockSpec((1, F, D), lambda l: (l, 0, 0)),          # w2
        pl.BlockSpec((1, 1, D), lambda l: (l, 0, 0)),          # b2
        pl.BlockSpec((1, 1, D), lambda l: (l, 0, 0)),          # gamma0
        pl.BlockSpec((1, 1, D), lambda l: (l, 0, 0)),          # beta0
        pl.BlockSpec((1, 1, D), lambda l: (l, 0, 0)),          # gamma1
        pl.BlockSpec((1, 1, D), lambda l: (l, 0, 0)),          # beta1
        pl.BlockSpec(memory_space=pltpu.MemorySpace.SMEM),     # scales (L,)
    ]
    args = [x, params["wqkv"], params["w1"], params["b1"], params["w2"],
            params["b2"], params["gamma0"], params["beta0"],
            params["gamma1"], params["beta1"], params["scales"]]
    if has_mask:
        mask_add = (1.0 - mask.astype(jnp.float32)).reshape(B, 1, S) * -1e9
        in_specs.append(pl.BlockSpec((B, 1, S), lambda l: (0, 0, 0)))
        args.append(mask_add)

    kernel = functools.partial(_router_encoding_kernel, n_iter,
                               (B, S, D, F), has_mask)
    return pl.pallas_call(
        kernel,
        out_shape=jax.ShapeDtypeStruct((B, S, D), x.dtype),
        grid=(L,),
        in_specs=in_specs,
        out_specs=pl.BlockSpec((B, S, D), lambda l: (0, 0, 0)),
        scratch_shapes=[pltpu.VMEM((B, S, D), jnp.float32)],   # resident activation
        compiler_params=pltpu.CompilerParams(
            dimension_semantics=("arbitrary",)),               # layers are sequential
    )(*args)


# ----------------------------------------------------------------------------
# Pure-JAX reference (same math) for correctness checks
# ----------------------------------------------------------------------------
def _reference(x, params, mask=None, n_iter=2):
    B, S, D = x.shape
    L = params["scales"].shape[0]
    madd = (jnp.zeros((B, 1, S), jnp.float32) if mask is None else
            (1.0 - mask.astype(jnp.float32)).reshape(B, 1, S) * -1e9)
    out = x
    for i in range(L):
        wqkv = params["wqkv"][i]
        q = out @ wqkv[:, :D]
        k = out @ wqkv[:, D:2 * D]
        v = out @ wqkv[:, 2 * D:]
        logits = jnp.einsum("bqd,bkd->bqk", q, k) / math.sqrt(D) + madd
        b = jnp.zeros_like(logits)
        s = jnp.zeros_like(q)
        for _ in range(n_iter):
            c = jax.nn.softmax(logits + b, axis=-1)
            s = jnp.einsum("bqk,bkd->bqd", c, v)
            b = b + jnp.einsum("bqd,bkd->bqk", s, k) / math.sqrt(D)
        out = _layernorm(out + params["scales"][i] * s,
                         params["gamma0"][i], params["beta0"][i])
        h = jnp.maximum(out @ params["w1"][i] + params["b1"][i], 0.0)
        f = h @ params["w2"][i] + params["b2"][i]
        out = _layernorm(out + f, params["gamma1"][i], params["beta1"][i])
    return out


# ----------------------------------------------------------------------------
# Deterministic parameter init (stacked over layers)
# ----------------------------------------------------------------------------
def init_params(key, num_layers, D, F):
    per = []
    for _ in range(num_layers):
        key, k0, k1, k2, k3, k4 = jax.random.split(key, 6)
        wq = jax.random.normal(k0, (D, D), jnp.float32) / math.sqrt(D)
        wk = jax.random.normal(k1, (D, D), jnp.float32) / math.sqrt(D)
        wv = jax.random.normal(k2, (D, D), jnp.float32) / math.sqrt(D)
        per.append(dict(
            wqkv=jnp.concatenate([wq, wk, wv], axis=1),           # (D, 3D)
            w1=jax.random.normal(k3, (D, F), jnp.float32) / math.sqrt(D),
            b1=jnp.zeros((1, F), jnp.float32),
            w2=jax.random.normal(k4, (F, D), jnp.float32) / math.sqrt(F),
            b2=jnp.zeros((1, D), jnp.float32),
            gamma0=jnp.ones((1, D), jnp.float32),
            beta0=jnp.zeros((1, D), jnp.float32),
            gamma1=jnp.ones((1, D), jnp.float32),
            beta1=jnp.zeros((1, D), jnp.float32),
        ))
    stacked = {k: jnp.stack([p[k] for p in per], axis=0) for k in per[0]}
    stacked["scales"] = jnp.ones((num_layers,), jnp.float32)  # nn.Parameter(ones)
    return stacked


if __name__ == "__main__":
    B, S, D, F = 2, 8, 32, 64
    NUM_LAYERS, N_ITER = 2, 2

    key = jax.random.PRNGKey(0)
    kx, kp, km = jax.random.split(key, 3)
    x = jax.random.normal(kx, (B, S, D), jnp.float32)
    params = init_params(kp, NUM_LAYERS, D, F)

    # unmasked path
    out = jax.block_until_ready(router_encoding(x, params, mask=None, n_iter=N_ITER))
    ref = _reference(x, params, mask=None, n_iter=N_ITER)
    assert out.shape == (B, S, D)
    assert jnp.allclose(out, ref, atol=1e-4, rtol=1e-4), "mismatch vs JAX reference"

    # masked path (key-axis additive mask)
    mask = (jax.random.uniform(km, (B, S)) > 0.3).astype(jnp.float32)
    mask = mask.at[:, 0].set(1.0)  # keep at least one valid key per batch
    out_m = jax.block_until_ready(router_encoding(x, params, mask=mask, n_iter=N_ITER))
    ref_m = _reference(x, params, mask=mask, n_iter=N_ITER)
    assert jnp.allclose(out_m, ref_m, atol=1e-4, rtol=1e-4), "masked mismatch"

    print("KERNEL_OK")
</pallas_src>

<mosaic_0001>
module attributes {stable_mosaic.version = 11 : i64} {
  func.func @_router_encoding_kernel(%arg0: i32, %arg1: memref<2x8x32xf32, #tpu.memory_space<vmem>>, %arg2: memref<1x32x96xf32, #tpu.memory_space<vmem>>, %arg3: memref<1x32x64xf32, #tpu.memory_space<vmem>>, %arg4: memref<1x1x64xf32, #tpu.memory_space<vmem>>, %arg5: memref<1x64x32xf32, #tpu.memory_space<vmem>>, %arg6: memref<1x1x32xf32, #tpu.memory_space<vmem>>, %arg7: memref<1x1x32xf32, #tpu.memory_space<vmem>>, %arg8: memref<1x1x32xf32, #tpu.memory_space<vmem>>, %arg9: memref<1x1x32xf32, #tpu.memory_space<vmem>>, %arg10: memref<1x1x32xf32, #tpu.memory_space<vmem>>, %arg11: memref<2xf32, #tpu.memory_space<smem>>, %arg12: memref<2x8x32xf32, #tpu.memory_space<vmem>>, %arg13: memref<2x8x32xf32, #tpu.memory_space<vmem>>) attributes {dimension_semantics = [#tpu.dimension_semantics<arbitrary>], iteration_bounds = array<i64: 2>, scalar_prefetch = 0 : i64, scratch_operands = 1 : i64, tpu.core_type = #tpu.core_type<tc>, window_params = [{pipeline_mode = #tpu.pipeline_mode<synchronous>, transform_indices = @transform_0, window_bounds = array<i64: 2, 8, 32>}, {transform_indices = @transform_1, window_bounds = array<i64: 1, 32, 96>}, {transform_indices = @transform_2, window_bounds = array<i64: 1, 32, 64>}, {transform_indices = @transform_3, window_bounds = array<i64: 1, 1, 64>}, {transform_indices = @transform_4, window_bounds = array<i64: 1, 64, 32>}, {transform_indices = @transform_5, window_bounds = array<i64: 1, 1, 32>}, {transform_indices = @transform_6, window_bounds = array<i64: 1, 1, 32>}, {transform_indices = @transform_7, window_bounds = array<i64: 1, 1, 32>}, {transform_indices = @transform_8, window_bounds = array<i64: 1, 1, 32>}, {transform_indices = @transform_9, window_bounds = array<i64: 1, 1, 32>}, {transform_indices = @transform_10, window_bounds = array<i64: 2>}, {pipeline_mode = #tpu.pipeline_mode<synchronous>, transform_indices = @transform_11, window_bounds = array<i64: 2, 8, 32>}]} {
    %c0_i32 = arith.constant 0 : i32
    %0 = arith.cmpi eq, %arg0, %c0_i32 : i32
    %1 = arith.extui %0 : i1 to i32
    %c0_i32_0 = arith.constant 0 : i32
    %2 = arith.cmpi ne, %1, %c0_i32_0 : i32
    scf.if %2 {
      %c0_60 = arith.constant 0 : index
      %c0_61 = arith.constant 0 : index
      %c0_62 = arith.constant 0 : index
      %120 = vector.load %arg1[%c0_60, %c0_61, %c0_62] : memref<2x8x32xf32, #tpu.memory_space<vmem>>, vector<2x8x32xf32>
      %c0_63 = arith.constant 0 : index
      %c0_64 = arith.constant 0 : index
      %c0_65 = arith.constant 0 : index
      %121 = vector.load %arg13[%c0_63, %c0_64, %c0_65] : memref<2x8x32xf32, #tpu.memory_space<vmem>>, vector<2x8x32xf32>
      tpu.vector_store %arg13[%c0_63, %c0_64, %c0_65], %120 {strides = array<i32>} : memref<2x8x32xf32, #tpu.memory_space<vmem>>, vector<2x8x32xf32>,
    } else {
    }
    %c0 = arith.constant 0 : index
    %c0_1 = arith.constant 0 : index
    %c0_2 = arith.constant 0 : index
    %3 = vector.load %arg13[%c0, %c0_1, %c0_2] : memref<2x8x32xf32, #tpu.memory_space<vmem>>, vector<2x8x32xf32>
    %4 = vector.shape_cast %3 : vector<2x8x32xf32> to vector<16x32xf32>
    %c0_3 = arith.constant 0 : index
    %c0_4 = arith.constant 0 : index
    %c0_5 = arith.constant 0 : index
    %5 = vector.load %arg2[%c0_3, %c0_4, %c0_5] : memref<1x32x96xf32, #tpu.memory_space<vmem>>, vector<1x32x96xf32>
    %6 = vector.shape_cast %5 : vector<1x32x96xf32> to vector<32x96xf32>
    %cst = arith.constant dense<0.000000e+00> : vector<16x96xf32>
    %7 = tpu.matmul %4, %6, %cst {dimension_numbers = #tpu.dot_dimension_numbers<[1], [0], [0], [1], [0, 0, 1, 1], [], []>} : vector<16x32xf32>, vector<32x96xf32>, vector<16x96xf32> -> vector<16x96xf32>
    %8 = vector.extract_strided_slice %7 {offsets = [0, 0], sizes = [16, 32], strides = [1, 1]} : vector<16x96xf32> to vector<16x32xf32>
    %9 = vector.shape_cast %8 : vector<16x32xf32> to vector<2x8x32xf32>
    %10 = vector.extract_strided_slice %7 {offsets = [0, 32], sizes = [16, 32], strides = [1, 1]} : vector<16x96xf32> to vector<16x32xf32>
    %11 = vector.shape_cast %10 : vector<16x32xf32> to vector<2x8x32xf32>
    %12 = vector.extract_strided_slice %7 {offsets = [0, 64], sizes = [16, 32], strides = [1, 1]} : vector<16x96xf32> to vector<16x32xf32>
    %13 = vector.shape_cast %12 : vector<16x32xf32> to vector<2x8x32xf32>
    "tpu.trace_start"() <{level = 10 : i32, message = "bqd,bkd->bqk"}> : () -> ()
    %cst_6 = arith.constant dense<0.000000e+00> : vector<2x8x8xf32>
    %14 = tpu.matmul %9, %11, %cst_6 {dimension_numbers = #tpu.dot_dimension_numbers<[2], [2], [1], [1], [0, 0, 0, 1, 1, 1], [0], [0]>} : vector<2x8x32xf32>, vector<2x8x32xf32>, vector<2x8x8xf32> -> vector<2x8x8xf32>
    "tpu.trace_stop"() : () -> ()
    %cst_7 = arith.constant 0.176776692 : f32
    %15 = vector.broadcast %cst_7 : f32 to vector<2x8x8xf32>
    %16 = arith.mulf %14, %15 : vector<2x8x8xf32>
    %cst_8 = arith.constant 0.000000e+00 : f32
    %17 = vector.broadcast %cst_8 : f32 to vector<2x8x8xf32>
    %18 = arith.addf %16, %17 : vector<2x8x8xf32>
    %cst_9 = arith.constant dense<0xFF800000> : vector<2x8xf32>
    %19 = vector.multi_reduction <maximumf>, %18, %cst_9 [2] : vector<2x8x8xf32> to vector<2x8xf32>
    %20 = vector.shape_cast %19 : vector<2x8xf32> to vector<2x8x1xf32>
    %21 = vector.broadcast %20 : vector<2x8x1xf32> to vector<2x8x8xf32>
    %22 = arith.subf %18, %21 : vector<2x8x8xf32>
    %23 = math.exp %22 : vector<2x8x8xf32>
    %cst_10 = arith.constant dense<0.000000e+00> : vector<2x8xf32>
    %24 = vector.multi_reduction <add>, %23, %cst_10 [2] : vector<2x8x8xf32> to vector<2x8xf32>
    %25 = vector.shape_cast %24 : vector<2x8xf32> to vector<2x8x1xf32>
    %26 = tpu.reciprocal %25 : vector<2x8x1xf32> -> vector<2x8x1xf32>
    %27 = vector.broadcast %26 : vector<2x8x1xf32> to vector<2x8x8xf32>
    %28 = arith.mulf %23, %27 : vector<2x8x8xf32>
    "tpu.trace_start"() <{level = 10 : i32, message = "bqk,bkd->bqd"}> : () -> ()
    %cst_11 = arith.constant dense<0.000000e+00> : vector<2x8x32xf32>
    %29 = tpu.matmul %28, %13, %cst_11 {dimension_numbers = #tpu.dot_dimension_numbers<[2], [1], [1], [2], [0, 0, 0, 1, 1, 2], [0], [0]>} : vector<2x8x8xf32>, vector<2x8x32xf32>, vector<2x8x32xf32> -> vector<2x8x32xf32>
    "tpu.trace_stop"() : () -> ()
    "tpu.trace_start"() <{level = 10 : i32, message = "bqd,bkd->bqk"}> : () -> ()
    %cst_12 = arith.constant dense<0.000000e+00> : vector<2x8x8xf32>
    %30 = tpu.matmul %29, %11, %cst_12 {dimension_numbers = #tpu.dot_dimension_numbers<[2], [2], [1], [1], [0, 0, 0, 1, 1, 1], [0], [0]>} : vector<2x8x32xf32>, vector<2x8x32xf32>, vector<2x8x8xf32> -> vector<2x8x8xf32>
    "tpu.trace_stop"() : () -> ()
    %cst_13 = arith.constant 0.176776692 : f32
    %31 = vector.broadcast %cst_13 : f32 to vector<2x8x8xf32>
    %32 = arith.mulf %30, %31 : vector<2x8x8xf32>
    %33 = arith.addf %17, %32 : vector<2x8x8xf32>
    %34 = arith.addf %16, %33 : vector<2x8x8xf32>
    %cst_14 = arith.constant dense<0xFF800000> : vector<2x8xf32>
    %35 = vector.multi_reduction <maximumf>, %34, %cst_14 [2] : vector<2x8x8xf32> to vector<2x8xf32>
    %36 = vector.shape_cast %35 : vector<2x8xf32> to vector<2x8x1xf32>
    %37 = vector.broadcast %36 : vector<2x8x1xf32> to vector<2x8x8xf32>
    %38 = arith.subf %34, %37 : vector<2x8x8xf32>
    %39 = math.exp %38 : vector<2x8x8xf32>
    %cst_15 = arith.constant dense<0.000000e+00> : vector<2x8xf32>
    %40 = vector.multi_reduction <add>, %39, %cst_15 [2] : vector<2x8x8xf32> to vector<2x8xf32>
    %41 = vector.shape_cast %40 : vector<2x8xf32> to vector<2x8x1xf32>
    %42 = tpu.reciprocal %41 : vector<2x8x1xf32> -> vector<2x8x1xf32>
    %43 = vector.broadcast %42 : vector<2x8x1xf32> to vector<2x8x8xf32>
    %44 = arith.mulf %39, %43 : vector<2x8x8xf32>
    "tpu.trace_start"() <{level = 10 : i32, message = "bqk,bkd->bqd"}> : () -> ()
    %cst_16 = arith.constant dense<0.000000e+00> : vector<2x8x32xf32>
    %45 = tpu.matmul %44, %13, %cst_16 {dimension_numbers = #tpu.dot_dimension_numbers<[2], [1], [1], [2], [0, 0, 0, 1, 1, 2], [0], [0]>} : vector<2x8x8xf32>, vector<2x8x32xf32>, vector<2x8x32xf32> -> vector<2x8x32xf32>
    "tpu.trace_stop"() : () -> ()
    %46 = arith.index_cast %arg0 : i32 to index
    %47 = memref.load %arg11[%46] : memref<2xf32, #tpu.memory_space<smem>>
    %48 = vector.shape_cast %45 : vector<2x8x32xf32> to vector<16x32xf32>
    %49 = vector.broadcast %47 : f32 to vector<16x32xf32>
    %50 = arith.mulf %49, %48 : vector<16x32xf32>
    %51 = arith.addf %4, %50 : vector<16x32xf32>
    %c0_17 = arith.constant 0 : index
    %c0_18 = arith.constant 0 : index
    %c0_19 = arith.constant 0 : index
    %52 = vector.load %arg7[%c0_17, %c0_18, %c0_19] : memref<1x1x32xf32, #tpu.memory_space<vmem>>, vector<1x1x32xf32>
    %53 = vector.shape_cast %52 : vector<1x1x32xf32> to vector<1x32xf32>
    %c0_20 = arith.constant 0 : index
    %c0_21 = arith.constant 0 : index
    %c0_22 = arith.constant 0 : index
    %54 = vector.load %arg8[%c0_20, %c0_21, %c0_22] : memref<1x1x32xf32, #tpu.memory_space<vmem>>, vector<1x1x32xf32>
    %55 = vector.shape_cast %54 : vector<1x1x32xf32> to vector<1x32xf32>
    %cst_23 = arith.constant dense<0.000000e+00> : vector<16xf32>
    %56 = vector.multi_reduction <add>, %51, %cst_23 [1] : vector<16x32xf32> to vector<16xf32>
    %57 = vector.shape_cast %56 : vector<16xf32> to vector<16x1xf32>
    %cst_24 = arith.constant 3.200000e+01 : f32
    %58 = vector.broadcast %cst_24 : f32 to vector<16x1xf32>
    %59 = arith.divf %57, %58 : vector<16x1xf32>
    %60 = vector.broadcast %59 : vector<16x1xf32> to vector<16x32xf32>
    %61 = arith.subf %51, %60 : vector<16x32xf32>
    %62 = arith.mulf %61, %61 : vector<16x32xf32>
    %cst_25 = arith.constant dense<0.000000e+00> : vector<16xf32>
    %63 = vector.multi_reduction <add>, %62, %cst_25 [1] : vector<16x32xf32> to vector<16xf32>
    %64 = vector.shape_cast %63 : vector<16xf32> to vector<16x1xf32>
    %cst_26 = arith.constant 3.200000e+01 : f32
    %65 = vector.broadcast %cst_26 : f32 to vector<16x1xf32>
    %66 = arith.divf %64, %65 : vector<16x1xf32>
    %cst_27 = arith.constant 9.99999974E-6 : f32
    %67 = vector.broadcast %cst_27 : f32 to vector<16x1xf32>
    %68 = arith.addf %66, %67 : vector<16x1xf32>
    %69 = math.rsqrt %68 : vector<16x1xf32>
    %70 = vector.broadcast %69 : vector<16x1xf32> to vector<16x32xf32>
    %71 = arith.mulf %61, %70 : vector<16x32xf32>
    %72 = vector.broadcast %53 : vector<1x32xf32> to vector<16x32xf32>
    %73 = arith.mulf %71, %72 : vector<16x32xf32>
    %74 = vector.broadcast %55 : vector<1x32xf32> to vector<16x32xf32>
    %75 = arith.addf %73, %74 : vector<16x32xf32>
    %c0_28 = arith.constant 0 : index
    %c0_29 = arith.constant 0 : index
    %c0_30 = arith.constant 0 : index
    %76 = vector.load %arg3[%c0_28, %c0_29, %c0_30] : memref<1x32x64xf32, #tpu.memory_space<vmem>>, vector<1x32x64xf32>
    %77 = vector.shape_cast %76 : vector<1x32x64xf32> to vector<32x64xf32>
    %cst_31 = arith.constant dense<0.000000e+00> : vector<16x64xf32>
    %78 = tpu.matmul %75, %77, %cst_31 {dimension_numbers = #tpu.dot_dimension_numbers<[1], [0], [0], [1], [0, 0, 1, 1], [], []>} : vector<16x32xf32>, vector<32x64xf32>, vector<16x64xf32> -> vector<16x64xf32>
    %c0_32 = arith.constant 0 : index
    %c0_33 = arith.constant 0 : index
    %c0_34 = arith.constant 0 : index
    %79 = vector.load %arg4[%c0_32, %c0_33, %c0_34] : memref<1x1x64xf32, #tpu.memory_space<vmem>>, vector<1x1x64xf32>
    %80 = vector.shape_cast %79 : vector<1x1x64xf32> to vector<1x64xf32>
    %81 = vector.broadcast %80 : vector<1x64xf32> to vector<16x64xf32>
    %82 = arith.addf %78, %81 : vector<16x64xf32>
    %cst_35 = arith.constant 0.000000e+00 : f32
    %83 = vector.broadcast %cst_35 : f32 to vector<16x64xf32>
    %84 = arith.maximumf %82, %83 : vector<16x64xf32>
    %c0_36 = arith.constant 0 : index
    %c0_37 = arith.constant 0 : index
    %c0_38 = arith.constant 0 : index
    %85 = vector.load %arg5[%c0_36, %c0_37, %c0_38] : memref<1x64x32xf32, #tpu.memory_space<vmem>>, vector<1x64x32xf32>
    %86 = vector.shape_cast %85 : vector<1x64x32xf32> to vector<64x32xf32>
    %cst_39 = arith.constant dense<0.000000e+00> : vector<16x32xf32>
    %87 = tpu.matmul %84, %86, %cst_39 {dimension_numbers = #tpu.dot_dimension_numbers<[1], [0], [0], [1], [0, 0, 1, 1], [], []>} : vector<16x64xf32>, vector<64x32xf32>, vector<16x32xf32> -> vector<16x32xf32>
    %c0_40 = arith.constant 0 : index
    %c0_41 = arith.constant 0 : index
    %c0_42 = arith.constant 0 : index
    %88 = vector.load %arg6[%c0_40, %c0_41, %c0_42] : memref<1x1x32xf32, #tpu.memory_space<vmem>>, vector<1x1x32xf32>
    %89 = vector.shape_cast %88 : vector<1x1x32xf32> to vector<1x32xf32>
    %90 = vector.broadcast %89 : vector<1x32xf32> to vector<16x32xf32>
    %91 = arith.addf %87, %90 : vector<16x32xf32>
    %92 = arith.addf %75, %91 : vector<16x32xf32>
    %c0_43 = arith.constant 0 : index
    %c0_44 = arith.constant 0 : index
    %c0_45 = arith.constant 0 : index
    %93 = vector.load %arg9[%c0_43, %c0_44, %c0_45] : memref<1x1x32xf32, #tpu.memory_space<vmem>>, vector<1x1x32xf32>
    %94 = vector.shape_cast %93 : vector<1x1x32xf32> to vector<1x32xf32>
    %c0_46 = arith.constant 0 : index
    %c0_47 = arith.constant 0 : index
    %c0_48 = arith.constant 0 : index
    %95 = vector.load %arg10[%c0_46, %c0_47, %c0_48] : memref<1x1x32xf32, #tpu.memory_space<vmem>>, vector<1x1x32xf32>
    %96 = vector.shape_cast %95 : vector<1x1x32xf32> to vector<1x32xf32>
    %cst_49 = arith.constant dense<0.000000e+00> : vector<16xf32>
    %97 = vector.multi_reduction <add>, %92, %cst_49 [1] : vector<16x32xf32> to vector<16xf32>
    %98 = vector.shape_cast %97 : vector<16xf32> to vector<16x1xf32>
    %cst_50 = arith.constant 3.200000e+01 : f32
    %99 = vector.broadcast %cst_50 : f32 to vector<16x1xf32>
    %100 = arith.divf %98, %99 : vector<16x1xf32>
    %101 = vector.broadcast %100 : vector<16x1xf32> to vector<16x32xf32>
    %102 = arith.subf %92, %101 : vector<16x32xf32>
    %103 = arith.mulf %102, %102 : vector<16x32xf32>
    %cst_51 = arith.constant dense<0.000000e+00> : vector<16xf32>
    %104 = vector.multi_reduction <add>, %103, %cst_51 [1] : vector<16x32xf32> to vector<16xf32>
    %105 = vector.shape_cast %104 : vector<16xf32> to vector<16x1xf32>
    %cst_52 = arith.constant 3.200000e+01 : f32
    %106 = vector.broadcast %cst_52 : f32 to vector<16x1xf32>
    %107 = arith.divf %105, %106 : vector<16x1xf32>
    %cst_53 = arith.constant 9.99999974E-6 : f32
    %108 = vector.broadcast %cst_53 : f32 to vector<16x1xf32>
    %109 = arith.addf %107, %108 : vector<16x1xf32>
    %110 = math.rsqrt %109 : vector<16x1xf32>
    %111 = vector.broadcast %110 : vector<16x1xf32> to vector<16x32xf32>
    %112 = arith.mulf %102, %111 : vector<16x32xf32>
    %113 = vector.broadcast %94 : vector<1x32xf32> to vector<16x32xf32>
    %114 = arith.mulf %112, %113 : vector<16x32xf32>
    %115 = vector.broadcast %96 : vector<1x32xf32> to vector<16x32xf32>
    %116 = arith.addf %114, %115 : vector<16x32xf32>
    %117 = vector.shape_cast %116 : vector<16x32xf32> to vector<2x8x32xf32>
    %c0_54 = arith.constant 0 : index
    %c0_55 = arith.constant 0 : index
    %c0_56 = arith.constant 0 : index
    %118 = vector.load %arg13[%c0_54, %c0_55, %c0_56] : memref<2x8x32xf32, #tpu.memory_space<vmem>>, vector<2x8x32xf32>
    tpu.vector_store %arg13[%c0_54, %c0_55, %c0_56], %117 {strides = array<i32>} : memref<2x8x32xf32, #tpu.memory_space<vmem>>, vector<2x8x32xf32>,
    %c0_57 = arith.constant 0 : index
    %c0_58 = arith.constant 0 : index
    %c0_59 = arith.constant 0 : index
    %119 = vector.load %arg12[%c0_57, %c0_58, %c0_59] : memref<2x8x32xf32, #tpu.memory_space<vmem>>, vector<2x8x32xf32>
    tpu.vector_store %arg12[%c0_57, %c0_58, %c0_59], %117 {strides = array<i32>} : memref<2x8x32xf32, #tpu.memory_space<vmem>>, vector<2x8x32xf32>,
    return
  }
  func.func @transform_0(%arg0: i32) -> (i32, i32, i32) {
    %c0_i32 = arith.constant 0 : i32
    %c0_i32_0 = arith.constant 0 : i32
    %c0_i32_1 = arith.constant 0 : i32
    %c0_i32_2 = arith.constant 0 : i32
    return %c0_i32, %c0_i32_0, %c0_i32_1 : i32, i32, i32
  }
  func.func @transform_1(%arg0: i32) -> (i32, i32, i32) {
    %c0_i32 = arith.constant 0 : i32
    %c0_i32_0 = arith.constant 0 : i32
    %c0_i32_1 = arith.constant 0 : i32
    return %arg0, %c0_i32, %c0_i32_0 : i32, i32, i32
  }
  func.func @transform_2(%arg0: i32) -> (i32, i32, i32) {
    %c0_i32 = arith.constant 0 : i32
    %c0_i32_0 = arith.constant 0 : i32
    %c0_i32_1 = arith.constant 0 : i32
    return %arg0, %c0_i32, %c0_i32_0 : i32, i32, i32
  }
  func.func @transform_3(%arg0: i32) -> (i32, i32, i32) {
    %c0_i32 = arith.constant 0 : i32
    %c0_i32_0 = arith.constant 0 : i32
    %c0_i32_1 = arith.constant 0 : i32
    return %arg0, %c0_i32, %c0_i32_0 : i32, i32, i32
  }
  func.func @transform_4(%arg0: i32) -> (i32, i32, i32) {
    %c0_i32 = arith.constant 0 : i32
    %c0_i32_0 = arith.constant 0 : i32
    %c0_i32_1 = arith.constant 0 : i32
    return %arg0, %c0_i32, %c0_i32_0 : i32, i32, i32
  }
  func.func @transform_5(%arg0: i32) -> (i32, i32, i32) {
    %c0_i32 = arith.constant 0 : i32
    %c0_i32_0 = arith.constant 0 : i32
    %c0_i32_1 = arith.constant 0 : i32
    return %arg0, %c0_i32, %c0_i32_0 : i32, i32, i32
  }
  func.func @transform_6(%arg0: i32) -> (i32, i32, i32) {
    %c0_i32 = arith.constant 0 : i32
    %c0_i32_0 = arith.constant 0 : i32
    %c0_i32_1 = arith.constant 0 : i32
    return %arg0, %c0_i32, %c0_i32_0 : i32, i32, i32
  }
  func.func @transform_7(%arg0: i32) -> (i32, i32, i32) {
    %c0_i32 = arith.constant 0 : i32
    %c0_i32_0 = arith.constant 0 : i32
    %c0_i32_1 = arith.constant 0 : i32
    return %arg0, %c0_i32, %c0_i32_0 : i32, i32, i32
  }
  func.func @transform_8(%arg0: i32) -> (i32, i32, i32) {
    %c0_i32 = arith.constant 0 : i32
    %c0_i32_0 = arith.constant 0 : i32
    %c0_i32_1 = arith.constant 0 : i32
    return %arg0, %c0_i32, %c0_i32_0 : i32, i32, i32
  }
  func.func @transform_9(%arg0: i32) -> (i32, i32, i32) {
    %c0_i32 = arith.constant 0 : i32
    %c0_i32_0 = arith.constant 0 : i32
    %c0_i32_1 = arith.constant 0 : i32
    return %arg0, %c0_i32, %c0_i32_0 : i32, i32, i32
  }
  func.func @transform_10(%arg0: i32) -> i32 {
    %c0_i32 = arith.constant 0 : i32
    %c0_i32_0 = arith.constant 0 : i32
    return %c0_i32 : i32
  }
  func.func @transform_11(%arg0: i32) -> (i32, i32, i32) {
    %c0_i32 = arith.constant 0 : i32
    %c0_i32_0 = arith.constant 0 : i32
    %c0_i32_1 = arith.constant 0 : i32
    %c0_i32_2 = arith.constant 0 : i32
    return %c0_i32, %c0_i32_0, %c0_i32_1 : i32, i32, i32
  }
}

</mosaic_0001>

<llo_original>
// kernel: tpu_custom_call.1
$region0: #{tpu_custom_call.1}
  #allocation0 [shape = 'u32[]', space=smem, size = 0x4, offset = 0x4, fixed_abs, tag = 'smem constant byte address 0x4 - core index']
  #allocation1 [shape = 'u32[144,128]{1,0:T(1,128)}', space=vmem, size = 0x12000, scoped, tag = 'internal scratch']
  #allocation2 [shape = 'f32[2,8,32]{2,1,0:T(8,128)}', space=vmem, size = 0x2000, scoped, tag = 'scratch operand']
  %s0 = inlined_call_operand.vmem [shape: f32[2,8,32], index: 0, kind: input, shape index: {}]
  %s1 = inlined_call_operand.vmem [shape: f32[2,32,96], index: 1, kind: input, shape index: {}]
  %s2 = inlined_call_operand.vmem [shape: f32[2,32,64], index: 2, kind: input, shape index: {}]
  %s3 = inlined_call_operand.vmem [shape: f32[2,1,64], index: 3, kind: input, shape index: {}]
  %s4 = inlined_call_operand.vmem [shape: f32[2,64,32], index: 4, kind: input, shape index: {}]
  %s5 = inlined_call_operand.vmem [shape: f32[2,1,32], index: 5, kind: input, shape index: {}]
  %s6 = inlined_call_operand.vmem [shape: f32[2,1,32], index: 6, kind: input, shape index: {}]
  %s7 = inlined_call_operand.vmem [shape: f32[2,1,32], index: 7, kind: input, shape index: {}]
  %s8 = inlined_call_operand.vmem [shape: f32[2,1,32], index: 8, kind: input, shape index: {}]
  %s9 = inlined_call_operand.vmem [shape: f32[2,1,32], index: 9, kind: input, shape index: {}]
  %s10 = inlined_call_operand.vmem [shape: f32[2], index: 10, kind: input, shape index: {}]
  %s11 = inlined_call_operand.hbm [shape: f32[2,8,32], index: 11, kind: output, shape index: {}]
  %s12 = sld [smem:[#allocation0]]
  $region85: #{tpu_custom_call.1} parent=0
    _
  %s14 = ssub.s32 1, %s12
  %s15 = scalar_select 0, %s14, %s12
  $region1: #{tpu_custom_call.1} parent=0
    #allocation3 [shape = 'u8[512]{0}', space=smem, size = 0x200, scoped, tag = 'input window, operand 10, single buffered']
    #allocation4 [shape = 's32[2]{0}', space=sflag, size = 0x8, scoped, tag = 'scoped memory for tpu_custom_call.1']
    #allocation5 [shape = 's32[2]{0}', space=sflag, size = 0x8, scoped, tag = 'scoped memory for tpu_custom_call.1']
    #allocation6 [shape = 'u8[8192]{0}', space=vmem, size = 0x2000, scoped, tag = 'output window, operand 0, single buffered']
    %16 = vsyncpa [#allocation5], 0
    %17 = vsyncpa [#allocation4], 0
    loop: start=0, step=1, limit=4
    $region2: #{tpu_custom_call.1} parent=1 // loop_pre_header
      _
    $region3: #{tpu_custom_call.1} parent=1 // loop_header
      %s19 = sphi 0, %s23
      %p20 = scmp.ge.s32.totalorder %s19, 4
      %s27 = sphi 0, %s27
      %s29 = sphi 0, %s27
      %s30 = sphi 0, %s29
      %s44 = sphi 0, %s30
      %s50 = sphi 0, %s52
      %s53 = sphi 0, %s50
      %s54 = sphi 0, %s53
      %s70 = sphi 0, %s54
      %s76 = sphi 0, %s78
      %s79 = sphi 0, %s76
      %s80 = sphi 0, %s79
      %s96 = sphi 0, %s80
      %s102 = sphi 0, %s104
      %s105 = sphi 0, %s102
      %s106 = sphi 0, %s105
      %s122 = sphi 0, %s106
      %s128 = sphi 0, %s130
      %s131 = sphi 0, %s128
      %s132 = sphi 0, %s131
      %s148 = sphi 0, %s132
      %s154 = sphi 0, %s156
      %s157 = sphi 0, %s154
      %s158 = sphi 0, %s157
      %s174 = sphi 0, %s158
      %s180 = sphi 0, %s182
      %s183 = sphi 0, %s180
      %s184 = sphi 0, %s183
      %s200 = sphi 0, %s184
      %s206 = sphi 0, %s208
      %s209 = sphi 0, %s206
      %s210 = sphi 0, %s209
      %s226 = sphi 0, %s210
      %s232 = sphi 0, %s234
      %s235 = sphi 0, %s232
      %s236 = sphi 0, %s235
      %s252 = sphi 0, %s236
      %s258 = sphi 0, %s260
      %s261 = sphi 0, %s258
      %s262 = sphi 0, %s261
      %s278 = sphi 0, %s262
      %s282 = sphi 0, %s282
      %s284 = sphi 0, %s282
      %s285 = sphi 0, %s284
      %s299 = sphi 0, %s285
      %s303 = sphi 0, %s303
      %s305 = sphi 0, %s303
      %s306 = sphi 0, %s305
      %s320 = sphi 0, %s306
    $region4: #{tpu_custom_call.1} parent=1 // loop_header_branch
      %22 = sbr.rel (%p20) target = $region8
    $region5: #{tpu_custom_call.1} parent=1 // loop_body
      %s24 = ssub.s32 %s19, 1
      %s25 = ssub.s32 %s19, 2
      %s26 = sadd.s32 %s19, 1
      %s28 = sadd.s32 %s27, 1
      %p31 = scmp.eq.s32.totalorder %s19, 1
      %p32 = scmp.ne.s32.totalorder %s27, %s29
      %p33 = scmp.eq.s32.totalorder %s19, 0
      %p34 = por %p32, %p33
      %p35 = scmp.ne.s32.totalorder %s27, %s29
      %p36 = scmp.eq.s32.totalorder %s24, 1
      %p37 = por %p35, %p36
      %p38 = scmp.ne.s32.totalorder %s29, %s30
      %p39 = scmp.eq.s32.totalorder %s24, 0
      %p40 = por %p38, %p39
      %p41 = scmp.ne.s32.totalorder %s29, %s30
      %p42 = scmp.eq.s32.totalorder %s25, 1
      %p43 = por %p41, %p42
      %p45 = scmp.ne.s32.totalorder %s30, %s44
      %p46 = scmp.eq.s32.totalorder %s25, 0
      %p47 = por %p45, %p46
      %s48 = ssub.s32 %s19, %s26
      %p49 = scmp.eq.s32.totalorder %s48, 0
      %s51 = sadd.s32 %s50, 1
      %s52 = scalar_select %p49, %s50, %s51
      %p55 = pneg %p49
      %p56 = scmp.eq.s32.totalorder %s19, 1
      %p57 = por %p55, %p56
      %p58 = scmp.ne.s32.totalorder %s50, %s53
      %p59 = scmp.eq.s32.totalorder %s19, 0
      %p60 = por %p58, %p59
      %p61 = scmp.ne.s32.totalorder %s50, %s53
      %p62 = scmp.eq.s32.totalorder %s24, 1
      %p63 = por %p61, %p62
      %p64 = scmp.ne.s32.totalorder %s53, %s54
      %p65 = scmp.eq.s32.totalorder %s24, 0
      %p66 = por %p64, %p65
      %p67 = scmp.ne.s32.totalorder %s53, %s54
      %p68 = scmp.eq.s32.totalorder %s25, 1
      %p69 = por %p67, %p68
      %p71 = scmp.ne.s32.totalorder %s54, %s70
      %p72 = scmp.eq.s32.totalorder %s25, 0
      %p73 = por %p71, %p72
      %s74 = ssub.s32 %s19, %s26
      %p75 = scmp.eq.s32.totalorder %s74, 0
      %s77 = sadd.s32 %s76, 1
      %s78 = scalar_select %p75, %s76, %s77
      %p81 = pneg %p75
      %p82 = scmp.eq.s32.totalorder %s19, 1
      %p83 = por %p81, %p82
      %p84 = scmp.ne.s32.totalorder %s76, %s79
      %p85 = scmp.eq.s32.totalorder %s19, 0
      %p86 = por %p84, %p85
      %p87 = scmp.ne.s32.totalorder %s76, %s79
      %p88 = scmp.eq.s32.totalorder %s24, 1
      %p89 = por %p87, %p88
      %p90 = scmp.ne.s32.totalorder %s79, %s80
      %p91 = scmp.eq.s32.totalorder %s24, 0
      %p92 = por %p90, %p91
      %p93 = scmp.ne.s32.totalorder %s79, %s80
      %p94 = scmp.eq.s32.totalorder %s25, 1
      %p95 = por %p93, %p94
      %p97 = scmp.ne.s32.totalorder %s80, %s96
      %p98 = scmp.eq.s32.totalorder %s25, 0
      %p99 = por %p97, %p98
      %s100 = ssub.s32 %s19, %s26
      %p101 = scmp.eq.s32.totalorder %s100, 0
      %s103 = sadd.s32 %s102, 1
      %s104 = scalar_select %p101, %s102, %s103
      %p107 = pneg %p101
      %p108 = scmp.eq.s32.totalorder %s19, 1
      %p109 = por %p107, %p108
      %p110 = scmp.ne.s32.totalorder %s102, %s105
      %p111 = scmp.eq.s32.totalorder %s19, 0
      %p112 = por %p110, %p111
      %p113 = scmp.ne.s32.totalorder %s102, %s105
      %p114 = scmp.eq.s32.totalorder %s24, 1
      %p115 = por %p113, %p114
      %p116 = scmp.ne.s32.totalorder %s105, %s106
      %p117 = scmp.eq.s32.totalorder %s24, 0
      %p118 = por %p116, %p117
      %p119 = scmp.ne.s32.totalorder %s105, %s106
      %p120 = scmp.eq.s32.totalorder %s25, 1
      %p121 = por %p119, %p120
      %p123 = scmp.ne.s32.totalorder %s106, %s122
      %p124 = scmp.eq.s32.totalorder %s25, 0
      %p125 = por %p123, %p124
      %s126 = ssub.s32 %s19, %s26
      %p127 = scmp.eq.s32.totalorder %s126, 0
      %s129 = sadd.s32 %s128, 1
      %s130 = scalar_select %p127, %s128, %s129
      %p133 = pneg %p127
      %p134 = scmp.eq.s32.totalorder %s19, 1
      %p135 = por %p133, %p134
      %p136 = scmp.ne.s32.totalorder %s128, %s131
      %p137 = scmp.eq.s32.totalorder %s19, 0
      %p138 = por %p136, %p137
      %p139 = scmp.ne.s32.totalorder %s128, %s131
      %p140 = scmp.eq.s32.totalorder %s24, 1
      %p141 = por %p139, %p140
      %p142 = scmp.ne.s32.totalorder %s131, %s132
      %p143 = scmp.eq.s32.totalorder %s24, 0
      %p144 = por %p142, %p143
      %p145 = scmp.ne.s32.totalorder %s131, %s132
      %p146 = scmp.eq.s32.totalorder %s25, 1
      %p147 = por %p145, %p146
      %p149 = scmp.ne.s32.totalorder %s132, %s148
      %p150 = scmp.eq.s32.totalorder %s25, 0
      %p151 = por %p149, %p150
      %s152 = ssub.s32 %s19, %s26
      %p153 = scmp.eq.s32.totalorder %s152, 0
      %s155 = sadd.s32 %s154, 1
      %s156 = scalar_select %p153, %s154, %s155
      %p159 = pneg %p153
      %p160 = scmp.eq.s32.totalorder %s19, 1
      %p161 = por %p159, %p160
      %p162 = scmp.ne.s32.totalorder %s154, %s157
      %p163 = scmp.eq.s32.totalorder %s19, 0
      %p164 = por %p162, %p163
      %p165 = scmp.ne.s32.totalorder %s154, %s157
      %p166 = scmp.eq.s32.totalorder %s24, 1
      %p167 = por %p165, %p166
      %p168 = scmp.ne.s32.totalorder %s157, %s158
      %p169 = scmp.eq.s32.totalorder %s24, 0
      %p170 = por %p168, %p169
      %p171 = scmp.ne.s32.totalorder %s157, %s158
      %p172 = scmp.eq.s32.totalorder %s25, 1
      %p173 = por %p171, %p172
      %p175 = scmp.ne.s32.totalorder %s158, %s174
      %p176 = scmp.eq.s32.totalorder %s25, 0
      %p177 = por %p175, %p176
      %s178 = ssub.s32 %s19, %s26
      %p179 = scmp.eq.s32.totalorder %s178, 0
      %s181 = sadd.s32 %s180, 1
      %s182 = scalar_select %p179, %s180, %s181
      %p185 = pneg %p179
      %p186 = scmp.eq.s32.totalorder %s19, 1
      %p187 = por %p185, %p186
      %p188 = scmp.ne.s32.totalorder %s180, %s183
      %p189 = scmp.eq.s32.totalorder %s19, 0
      %p190 = por %p188, %p189
      %p191 = scmp.ne.s32.totalorder %s180, %s183
      %p192 = scmp.eq.s32.totalorder %s24, 1
      %p193 = por %p191, %p192
      %p194 = scmp.ne.s32.totalorder %s183, %s184
      %p195 = scmp.eq.s32.totalorder %s24, 0
      %p196 = por %p194, %p195
      %p197 = scmp.ne.s32.totalorder %s183, %s184
      %p198 = scmp.eq.s32.totalorder %s25, 1
      %p199 = por %p197, %p198
      %p201 = scmp.ne.s32.totalorder %s184, %s200
      %p202 = scmp.eq.s32.totalorder %s25, 0
      %p203 = por %p201, %p202
      %s204 = ssub.s32 %s19, %s26
      %p205 = scmp.eq.s32.totalorder %s204, 0
      %s207 = sadd.s32 %s206, 1
      %s208 = scalar_select %p205, %s206, %s207
      %p211 = pneg %p205
      %p212 = scmp.eq.s32.totalorder %s19, 1
      %p213 = por %p211, %p212
      %p214 = scmp.ne.s32.totalorder %s206, %s209
      %p215 = scmp.eq.s32.totalorder %s19, 0
      %p216 = por %p214, %p215
      %p217 = scmp.ne.s32.totalorder %s206, %s209
      %p218 = scmp.eq.s32.totalorder %s24, 1
      %p219 = por %p217, %p218
      %p220 = scmp.ne.s32.totalorder %s209, %s210
      %p221 = scmp.eq.s32.totalorder %s24, 0
      %p222 = por %p220, %p221
      %p223 = scmp.ne.s32.totalorder %s209, %s210
      %p224 = scmp.eq.s32.totalorder %s25, 1
      %p225 = por %p223, %p224
      %p227 = scmp.ne.s32.totalorder %s210, %s226
      %p228 = scmp.eq.s32.totalorder %s25, 0
      %p229 = por %p227, %p228
      %s230 = ssub.s32 %s19, %s26
      %p231 = scmp.eq.s32.totalorder %s230, 0
      %s233 = sadd.s32 %s232, 1
      %s234 = scalar_select %p231, %s232, %s233
      %p237 = pneg %p231
      %p238 = scmp.eq.s32.totalorder %s19, 1
      %p239 = por %p237, %p238
      %p240 = scmp.ne.s32.totalorder %s232, %s235
      %p241 = scmp.eq.s32.totalorder %s19, 0
      %p242 = por %p240, %p241
      %p243 = scmp.ne.s32.totalorder %s232, %s235
      %p244 = scmp.eq.s32.totalorder %s24, 1
      %p245 = por %p243, %p244
      %p246 = scmp.ne.s32.totalorder %s235, %s236
      %p247 = scmp.eq.s32.totalorder %s24, 0
      %p248 = por %p246, %p247
      %p249 = scmp.ne.s32.totalorder %s235, %s236
      %p250 = scmp.eq.s32.totalorder %s25, 1
      %p251 = por %p249, %p250
      %p253 = scmp.ne.s32.totalorder %s236, %s252
      %p254 = scmp.eq.s32.totalorder %s25, 0
      %p255 = por %p253, %p254
      %s256 = ssub.s32 %s19, %s26
      %p257 = scmp.eq.s32.totalorder %s256, 0
      %s259 = sadd.s32 %s258, 1
      %s260 = scalar_select %p257, %s258, %s259
      %p263 = pneg %p257
      %p264 = scmp.eq.s32.totalorder %s19, 1
      %p265 = por %p263, %p264
      %p266 = scmp.ne.s32.totalorder %s258, %s261
      %p267 = scmp.eq.s32.totalorder %s19, 0
      %p268 = por %p266, %p267
      %p269 = scmp.ne.s32.totalorder %s258, %s261
      %p270 = scmp.eq.s32.totalorder %s24, 1
      %p271 = por %p269, %p270
      %p272 = scmp.ne.s32.totalorder %s261, %s262
      %p273 = scmp.eq.s32.totalorder %s24, 0
      %p274 = por %p272, %p273
      %p275 = scmp.ne.s32.totalorder %s261, %s262
      %p276 = scmp.eq.s32.totalorder %s25, 1
      %p277 = por %p275, %p276
      %p279 = scmp.ne.s32.totalorder %s262, %s278
      %p280 = scmp.eq.s32.totalorder %s25, 0
      %p281 = por %p279, %p280
      %s283 = sadd.s32 %s282, 1
      %p286 = scmp.eq.s32.totalorder %s19, 1
      %p287 = scmp.ne.s32.totalorder %s282, %s284
      %p288 = scmp.eq.s32.totalorder %s19, 0
      %p289 = por %p287, %p288
      %p290 = scmp.ne.s32.totalorder %s282, %s284
      %p291 = scmp.eq.s32.totalorder %s24, 1
      %p292 = por %p290, %p291
      %p293 = scmp.ne.s32.totalorder %s284, %s285
      %p294 = scmp.eq.s32.totalorder %s24, 0
      %p295 = por %p293, %p294
      %p296 = scmp.ne.s32.totalorder %s284, %s285
      %p297 = scmp.eq.s32.totalorder %s25, 1
      %p298 = por %p296, %p297
      %p300 = scmp.ne.s32.totalorder %s285, %s299
      %p301 = scmp.eq.s32.totalorder %s25, 0
      %p302 = por %p300, %p301
      %s304 = sadd.s32 %s303, 1
      %p307 = scmp.eq.s32.totalorder %s19, 1
      %p308 = scmp.ne.s32.totalorder %s303, %s305
      %p309 = scmp.eq.s32.totalorder %s19, 0
      %p310 = por %p308, %p309
      %p311 = scmp.ne.s32.totalorder %s303, %s305
      %p312 = scmp.eq.s32.totalorder %s24, 1
      %p313 = por %p311, %p312
      %p314 = scmp.ne.s32.totalorder %s305, %s306
      %p315 = scmp.eq.s32.totalorder %s24, 0
      %p316 = por %p314, %p315
      %p317 = scmp.ne.s32.totalorder %s305, %s306
      %p318 = scmp.eq.s32.totalorder %s25, 1
      %p319 = por %p317, %p318
      %p321 = scmp.ne.s32.totalorder %s306, %s320
      %p322 = scmp.eq.s32.totalorder %s25, 0
      %p323 = por %p321, %p322
      %p324 = scmp.le.s32.totalorder 1, %s19
      %p325 = scmp.lt.s32.totalorder %s19, 3
      %p326 = pnand %p324, %p325
      %p327 = pneg %p326
      // Predicated region
      $region9: #{tpu_custom_call.1} parent=5 // pred_check
        _
      $region10: #{tpu_custom_call.1} parent=5 // pred_check_branch
        %329 = sbr.rel (%p326) target = $region12
      $region11: #{tpu_custom_call.1} parent=5 // pred_region
        %s330 = ssub.s32 %s19, 1
        // Predicated region
        $region13: #{tpu_custom_call.1} parent=11 // pred_check
          %p331 = pneg %p40
        $region14: #{tpu_custom_call.1} parent=11 // pred_check_branch
          %333 = sbr.rel (%p331) target = $region16
        $region15: #{tpu_custom_call.1} parent=11 // pred_region
          _
        $region16: #{tpu_custom_call.1} parent=11 // pred_fallthru
          _
        // Predicated region
        $region17: #{tpu_custom_call.1} parent=11 // pred_check
          %p334 = pneg %p295
        $region18: #{tpu_custom_call.1} parent=11 // pred_check_branch
          %336 = sbr.rel (%p334) target = $region20
        $region19: #{tpu_custom_call.1} parent=11 // pred_region
          %s338 = ssub.s32 16, 16
          %339 = vsyncadd [#allocation5], %s338
          %s341 = sshll.u32 %s10, 4
          %s342 = int_to_ptr.vmem [resolvable:$true] %s341
          %344 = dma.vmem_to_smem %s342, 16, [#allocation3], [#allocation5]
        $region20: #{tpu_custom_call.1} parent=11 // pred_fallthru
          _
      $region12: #{tpu_custom_call.1} parent=5 // pred_fallthru
        _
      %p345 = scmp.lt.s32.totalorder %s19, 2
      // Predicated region
      $region21: #{tpu_custom_call.1} parent=5 // pred_check
        %p346 = pneg %p345
      $region22: #{tpu_custom_call.1} parent=5 // pred_check_branch
        %348 = sbr.rel (%p346) target = $region24
      $region23: #{tpu_custom_call.1} parent=5 // pred_region
        // Predicated region
        $region25: #{tpu_custom_call.1} parent=23 // pred_check
          %p349 = pneg %p60
        $region26: #{tpu_custom_call.1} parent=23 // pred_check_branch
          %351 = sbr.rel (%p349) target = $region28
        $region27: #{tpu_custom_call.1} parent=23 // pred_region
          %p352 = scmp.lt.s32.totalorder %s19, 1
          %s353 = scalar_select %p352, %s19, 1
          %s354 = smul.addr %s353, 4
          %s355 = smul.addr %s354, 8
          %s356 = scalar_lea.vmem %s1, %s355
        $region28: #{tpu_custom_call.1} parent=23 // pred_fallthru
          _
        // Predicated region
        $region29: #{tpu_custom_call.1} parent=23 // pred_check
          %p357 = pneg %p86
        $region30: #{tpu_custom_call.1} parent=23 // pred_check_branch
          %359 = sbr.rel (%p357) target = $region32
        $region31: #{tpu_custom_call.1} parent=23 // pred_region
          %p360 = scmp.lt.s32.totalorder %s19, 1
          %s361 = scalar_select %p360, %s19, 1
          %s362 = smul.addr %s361, 4
          %s363 = smul.addr %s362, 8
          %s364 = scalar_lea.vmem %s2, %s363
        $region32: #{tpu_custom_call.1} parent=23 // pred_fallthru
          _
        // Predicated region
        $region33: #{tpu_custom_call.1} parent=23 // pred_check
          %p365 = pneg %p112
        $region34: #{tpu_custom_call.1} parent=23 // pred_check_branch
          %367 = sbr.rel (%p365) target = $region36
        $region35: #{tpu_custom_call.1} parent=23 // pred_region
          %p368 = scmp.lt.s32.totalorder %s19, 1
          %s369 = scalar_select %p368, %s19, 1
          %s370 = scalar_lea.vmem %s3, %s369
        $region36: #{tpu_custom_call.1} parent=23 // pred_fallthru
          _
        // Predicated region
        $region37: #{tpu_custom_call.1} parent=23 // pred_check
          %p371 = pneg %p138
        $region38: #{tpu_custom_call.1} parent=23 // pred_check_branch
          %373 = sbr.rel (%p371) target = $region40
        $region39: #{tpu_custom_call.1} parent=23 // pred_region
          %p374 = scmp.lt.s32.totalorder %s19, 1
          %s375 = scalar_select %p374, %s19, 1
          %s376 = smul.addr %s375, 8
          %s377 = smul.addr %s376, 8
          %s378 = scalar_lea.vmem %s4, %s377
        $region40: #{tpu_custom_call.1} parent=23 // pred_fallthru
          _
        // Predicated region
        $region41: #{tpu_custom_call.1} parent=23 // pred_check
          %p379 = pneg %p164
        $region42: #{tpu_custom_call.1} parent=23 // pred_check_branch
          %381 = sbr.rel (%p379) target = $region44
        $region43: #{tpu_custom_call.1} parent=23 // pred_region
          %p382 = scmp.lt.s32.totalorder %s19, 1
          %s383 = scalar_select %p382, %s19, 1
          %s384 = scalar_lea.vmem %s5, %s383
        $region44: #{tpu_custom_call.1} parent=23 // pred_fallthru
          _
        // Predicated region
        $region45: #{tpu_custom_call.1} parent=23 // pred_check
          %p385 = pneg %p190
        $region46: #{tpu_custom_call.1} parent=23 // pred_check_branch
          %387 = sbr.rel (%p385) target = $region48
        $region47: #{tpu_custom_call.1} parent=23 // pred_region
          %p388 = scmp.lt.s32.totalorder %s19, 1
          %s389 = scalar_select %p388, %s19, 1
          %s390 = scalar_lea.vmem %s6, %s389
        $region48: #{tpu_custom_call.1} parent=23 // pred_fallthru
          _
        // Predicated region
        $region49: #{tpu_custom_call.1} parent=23 // pred_check
          %p391 = pneg %p216
        $region50: #{tpu_custom_call.1} parent=23 // pred_check_branch
          %393 = sbr.rel (%p391) target = $region52
        $region51: #{tpu_custom_call.1} parent=23 // pred_region
          %p394 = scmp.lt.s32.totalorder %s19, 1
          %s395 = scalar_select %p394, %s19, 1
          %s396 = scalar_lea.vmem %s7, %s395
        $region52: #{tpu_custom_call.1} parent=23 // pred_fallthru
          _
        // Predicated region
        $region53: #{tpu_custom_call.1} parent=23 // pred_check
          %p397 = pneg %p242
        $region54: #{tpu_custom_call.1} parent=23 // pred_check_branch
          %399 = sbr.rel (%p397) target = $region56
        $region55: #{tpu_custom_call.1} parent=23 // pred_region
          %p400 = scmp.lt.s32.totalorder %s19, 1
          %s401 = scalar_select %p400, %s19, 1
          %s402 = scalar_lea.vmem %s8, %s401
        $region56: #{tpu_custom_call.1} parent=23 // pred_fallthru
          _
        // Predicated region
        $region57: #{tpu_custom_call.1} parent=23 // pred_check
          %p403 = pneg %p268
        $region58: #{tpu_custom_call.1} parent=23 // pred_check_branch
          %405 = sbr.rel (%p403) target = $region60
        $region59: #{tpu_custom_call.1} parent=23 // pred_region
          %p406 = scmp.lt.s32.totalorder %s19, 1
          %s407 = scalar_select %p406, %s19, 1
          %s408 = scalar_lea.vmem %s9, %s407
        $region60: #{tpu_custom_call.1} parent=23 // pred_fallthru
          _
      $region24: #{tpu_custom_call.1} parent=5 // pred_fallthru
        _
      %p409 = scmp.le.s32.totalorder 1, %s19
      %p410 = scmp.lt.s32.totalorder %s19, 3
      %p411 = pnand %p409, %p410
      %p412 = pneg %p411
      // Predicated region
      $region61: #{tpu_custom_call.1} parent=5 // pred_check
        _
      $region62: #{tpu_custom_call.1} parent=5 // pred_check_branch
        %414 = sbr.rel (%p411) target = $region64
      $region63: #{tpu_custom_call.1} parent=5 // pred_region
        %s415 = ssub.s32 %s19, 1
        // Predicated region
        $region65: #{tpu_custom_call.1} parent=63 // pred_check
          %p416 = pneg %p295
        $region66: #{tpu_custom_call.1} parent=63 // pred_check_branch
          %418 = sbr.rel (%p416) target = $region68
        $region67: #{tpu_custom_call.1} parent=63 // pred_region
          %419 = dma.done [#allocation5], 16
        $region68: #{tpu_custom_call.1} parent=63 // pred_fallthru
          _
        %420 = sfence
        %p421 = pneg %p40
        %p422 = pneg %p37
        %p423 = scmp.lt.s32.totalorder %s24, 1
        %s424 = scalar_select %p423, %s24, 1
        %s425 = smul.addr %s424, 4
        %s426 = smul.addr %s425, 8
        %s427 = scalar_lea.vmem %s1, %s426
        %p428 = pneg %p66
        %p429 = pneg %p63
        %p430 = scmp.lt.s32.totalorder %s24, 1
        %s431 = scalar_select %p430, %s24, 1
        %s432 = smul.addr %s431, 4
        %s433 = smul.addr %s432, 8
        %s434 = scalar_lea.vmem %s2, %s433
        %p435 = pneg %p92
        %p436 = pneg %p89
        %p437 = scmp.lt.s32.totalorder %s24, 1
        %s438 = scalar_select %p437, %s24, 1
        %s439 = scalar_lea.vmem %s3, %s438
        %p440 = pneg %p118
        %p441 = pneg %p115
        %p442 = scmp.lt.s32.totalorder %s24, 1
        %s443 = scalar_select %p442, %s24, 1
        %s444 = smul.addr %s443, 8
        %s445 = smul.addr %s444, 8
        %s446 = scalar_lea.vmem %s4, %s445
        %p447 = pneg %p144
        %p448 = pneg %p141
        %p449 = scmp.lt.s32.totalorder %s24, 1
        %s450 = scalar_select %p449, %s24, 1
        %s451 = scalar_lea.vmem %s5, %s450
        %p452 = pneg %p170
        %p453 = pneg %p167
        %p454 = scmp.lt.s32.totalorder %s24, 1
        %s455 = scalar_select %p454, %s24, 1
        %s456 = scalar_lea.vmem %s6, %s455
        %p457 = pneg %p196
        %p458 = pneg %p193
        %p459 = scmp.lt.s32.totalorder %s24, 1
        %s460 = scalar_select %p459, %s24, 1
        %s461 = scalar_lea.vmem %s7, %s460
        %p462 = pneg %p222
        %p463 = pneg %p219
        %p464 = scmp.lt.s32.totalorder %s24, 1
        %s465 = scalar_select %p464, %s24, 1
        %s466 = scalar_lea.vmem %s8, %s465
        %p467 = pneg %p248
        %p468 = pneg %p245
        %p469 = scmp.lt.s32.totalorder %s24, 1
        %s470 = scalar_select %p469, %s24, 1
        %s471 = scalar_lea.vmem %s9, %s470
        %p472 = pneg %p274
        %p473 = pneg %p271
        %p474 = pneg %p295
        %p475 = pneg %p292
        %p476 = pneg %p316
        %p477 = pneg %p313
        %p478 = scmp.lt.s32.totalorder %s24, 1
        %s479 = scalar_select %p478, %s24, 1
        %s480 = smul.addr %s479, 4
        %s481 = smul.addr %s480, 8
        %s482 = scalar_lea.vmem %s1, %s481
        %p483 = scmp.lt.s32.totalorder %s24, 1
        %s484 = scalar_select %p483, %s24, 1
        %s485 = smul.addr %s484, 4
        %s486 = smul.addr %s485, 8
        %s487 = scalar_lea.vmem %s2, %s486
        %p488 = scmp.lt.s32.totalorder %s24, 1
        %s489 = scalar_select %p488, %s24, 1
        %s490 = scalar_lea.vmem %s3, %s489
        %p491 = scmp.lt.s32.totalorder %s24, 1
        %s492 = scalar_select %p491, %s24, 1
        %s493 = smul.addr %s492, 8
        %s494 = smul.addr %s493, 8
        %s495 = scalar_lea.vmem %s4, %s494
        %p496 = scmp.lt.s32.totalorder %s24, 1
        %s497 = scalar_select %p496, %s24, 1
        %s498 = scalar_lea.vmem %s5, %s497
        %p499 = scmp.lt.s32.totalorder %s24, 1
        %s500 = scalar_select %p499, %s24, 1
        %s501 = scalar_lea.vmem %s6, %s500
        %p502 = scmp.lt.s32.totalorder %s24, 1
        %s503 = scalar_select %p502, %s24, 1
        %s504 = scalar_lea.vmem %s7, %s503
        %p505 = scmp.lt.s32.totalorder %s24, 1
        %s506 = scalar_select %p505, %s24, 1
        %s507 = scalar_lea.vmem %s8, %s506
        %p508 = scmp.lt.s32.totalorder %s24, 1
        %s509 = scalar_select %p508, %s24, 1
        %s510 = scalar_lea.vmem %s9, %s509
        %p511 = scmp.eq.s32.totalorder %s24, 0
        // Predicated region
        $region69: #{tpu_custom_call.1} parent=63 // pred_check
          %p512 = pneg %p511
        $region70: #{tpu_custom_call.1} parent=63 // pred_check_branch
          %514 = sbr.rel (%p512) target = $region72
        $region71: #{tpu_custom_call.1} parent=63 // pred_region
          %v515 = vld [vmem:[%s0] sm:$0xff]
          %v516 = vld [vmem:[%s0 + $0x8] sm:$0xff]
          %vm517 = vcmask 261120
          %518 = vst.msk [vmem:[#allocation2] sm:$0xff] %vm517, %v515
          %519 = vst.msk [vmem:[#allocation2 + $0x8] sm:$0xff] %vm517, %v516
        $region72: #{tpu_custom_call.1} parent=63 // pred_fallthru
          _
        %v520 = vld [vmem:[#allocation2] sm:$0xff]
        %v521 = vld [vmem:[#allocation2 + $0x8] sm:$0xff]
        %v522 = vld [vmem:[%s482] sm:$0xff]
        %v523 = vld [vmem:[%s482 + $0x8] sm:$0xff]
        %v524 = vld [vmem:[%s482 + $0x10] sm:$0xff]
        %v525 = vld [vmem:[%s482 + $0x18] sm:$0xff]
        %vm526 = vcmask 261120
        %v528 = vsel %vm526, %v520, 0
        %v531 = vsel %vm526, %v521, 0
        %533 = vmatprep.subr.mxu0 0.0
        %534 = vmatpush1.msra.mxu0 %v522
        %535 = vmatprep.subr.mxu0 0.0
        %536 = vmatpush1.msra.mxu0 %v523
        %537 = vmatprep.subr.mxu0 0.0
        %538 = vmatpush1.msra.mxu0 %v524
        %539 = vmatprep.subr.mxu0 0.0
        %540 = vmatpush1.msra.mxu0 %v525
        %541 = vmatprep.subr.mxu0 0.0
        %542 = vmatpush1.msra.mxu0 0.0
        %543 = vmatprep.subr.mxu0 0.0
        %544 = vmatpush1.msra.mxu0 0.0
        %545 = vmatprep.subr.mxu0 0.0
        %546 = vmatpush1.msra.mxu0 0.0
        %547 = vmatprep.subr.mxu0 0.0
        %548 = vmatpush1.msra.mxu0 0.0
        %549 = vmatprep.subr.mxu0 0.0
        %550 = vmatpush1.msra.mxu0 0.0
        %551 = vmatprep.subr.mxu0 0.0
        %552 = vmatpush1.msra.mxu0 0.0
        %553 = vmatprep.subr.mxu0 0.0
        %554 = vmatpush1.msra.mxu0 0.0
        %555 = vmatprep.subr.mxu0 0.0
        %556 = vmatpush1.msra.mxu0 0.0
        %557 = vmatprep.subr.mxu0 0.0
        %558 = vmatpush1.msra.mxu0 0.0
        %559 = vmatprep.subr.mxu0 0.0
        %560 = vmatpush1.msra.mxu0 0.0
        %561 = vmatprep.subr.mxu0 0.0
        %562 = vmatpush1.msra.mxu0 0.0
        %563 = vmatprep.subr.mxu0 0.0
        %564 = vmatpush1.msra.mxu0 0.0
        %565 = vmatprep.subr.mxu0 0.0
        %566 = vmatpush1.msra.mxu0 0.0
        %567 = vmatprep.subr.mxu0 0.0
        %568 = vmatpush1.msra.mxu0 0.0
        %569 = vmatprep.subr.mxu0 0.0
        %570 = vmatpush1.msra.mxu0 0.0
        %571 = vmatprep.subr.mxu0 0.0
        %572 = vmatpush1.msra.mxu0 0.0
        %573 = vmatprep.subr.mxu0 0.0
        %574 = vmatpush1.msra.mxu0 0.0
        %575 = vmatprep.subr.mxu0 0.0
        %576 = vmatpush1.msra.mxu0 0.0
        %577 = vmatprep.subr.mxu0 0.0
        %578 = vmatpush1.msra.mxu0 0.0
        %579 = vmatprep.subr.mxu0 0.0
        %580 = vmatpush1.msra.mxu0 0.0
        %581 = vmatprep.subr.mxu0 0.0
        %582 = vmatpush1.msra.mxu0 0.0
        %583 = vmatprep.subr.mxu0 0.0
        %584 = vmatpush1.msra.mxu0 0.0
        %585 = vmatprep.subr.mxu0 0.0
        %586 = vmatpush1.msra.mxu0 0.0
        %587 = vmatprep.subr.mxu0 0.0
        %588 = vmatpush1.msra.mxu0 0.0
        %589 = vmatprep.subr.mxu0 0.0
        %590 = vmatpush1.msra.mxu0 0.0
        %591 = vmatprep.subr.mxu0 0.0
        %592 = vmatpush1.msra.mxu0 0.0
        %593 = vmatprep.subr.mxu0 0.0
        %594 = vmatpush1.msra.mxu0 0.0
        %595 = vmatprep.subr.mxu0 0.0
        %596 = vmatpush1.msra.mxu0 0.0
        %597 = vmatprep.mubr.f32.mxu0 0.0
        %598 = vmatmul.mubr.f32.gmra.mrb[0].mxu0 %v528
        %v599 = vpop.f32.mrb[0].mxu0
        %v600 = vadd.f32 0.0, %v599
        %v601 = vpop.f32.mrb[0].mxu0
        %602 = vmatprep.mubr.f32.mxu0 0.0
        %603 = vmatmul.mubr.f32.gmra.mrb[0].mxu0 %v531
        %v604 = vpop.f32.mrb[0].mxu0
        %v605 = vadd.f32 0.0, %v604
        %v606 = vpop.f32.mrb[0].mxu0
        %607 = vdwg.mxu0
        %609 = vrot.lane.b32.xlu0 %v600, 96
        %v610 = vpop.permute.xlu0 %609
        %v611 = vsel %vm526, %v600, 0
        %v613 = vsel %vm526, %v610, 0
        %615 = vmatprep.subr.mxu0 0.0
        %616 = vmatpush1.xpose.msra.mxu0 %v613
        %617 = vmatprep.subr.mxu0 0.0
        %618 = vmatpush1.xpose.msra.mxu0 0.0
        %619 = vmatprep.subr.mxu0 0.0
        %620 = vmatpush1.xpose.msra.mxu0 0.0
        %621 = vmatprep.subr.mxu0 0.0
        %622 = vmatpush1.xpose.msra.mxu0 0.0
        %623 = vmatprep.subr.mxu0 0.0
        %624 = vmatpush1.xpose.msra.mxu0 0.0
        %625 = vmatprep.subr.mxu0 0.0
        %626 = vmatpush1.xpose.msra.mxu0 0.0
        %627 = vmatprep.subr.mxu0 0.0
        %628 = vmatpush1.xpose.msra.mxu0 0.0
        %629 = vmatprep.subr.mxu0 0.0
        %630 = vmatpush1.xpose.msra.mxu0 0.0
        %631 = vmatprep.subr.mxu0 0.0
        %632 = vmatpush1.xpose.msra.mxu0 0.0
        %633 = vmatprep.subr.mxu0 0.0
        %634 = vmatpush1.xpose.msra.mxu0 0.0
        %635 = vmatprep.subr.mxu0 0.0
        %636 = vmatpush1.xpose.msra.mxu0 0.0
        %637 = vmatprep.subr.mxu0 0.0
        %638 = vmatpush1.xpose.msra.mxu0 0.0
        %639 = vmatprep.subr.mxu0 0.0
        %640 = vmatpush1.xpose.msra.mxu0 0.0
        %641 = vmatprep.subr.mxu0 0.0
        %642 = vmatpush1.xpose.msra.mxu0 0.0
        %643 = vmatprep.subr.mxu0 0.0
        %644 = vmatpush1.xpose.msra.mxu0 0.0
        %645 = vmatprep.subr.mxu0 0.0
        %646 = vmatpush1.xpose.msra.mxu0 0.0
        %647 = vmatprep.subr.mxu0 0.0
        %648 = vmatpush1.xpose.msra.mxu0 0.0
        %649 = vmatprep.subr.mxu0 0.0
        %650 = vmatpush1.xpose.msra.mxu0 0.0
        %651 = vmatprep.subr.mxu0 0.0
        %652 = vmatpush1.xpose.msra.mxu0 0.0
        %653 = vmatprep.subr.mxu0 0.0
        %654 = vmatpush1.xpose.msra.mxu0 0.0
        %655 = vmatprep.subr.mxu0 0.0
        %656 = vmatpush1.xpose.msra.mxu0 0.0
        %657 = vmatprep.subr.mxu0 0.0
        %658 = vmatpush1.xpose.msra.mxu0 0.0
        %659 = vmatprep.subr.mxu0 0.0
        %660 = vmatpush1.xpose.msra.mxu0 0.0
        %661 = vmatprep.subr.mxu0 0.0
        %662 = vmatpush1.xpose.msra.mxu0 0.0
        %663 = vmatprep.subr.mxu0 0.0
        %664 = vmatpush1.xpose.msra.mxu0 0.0
        %665 = vmatprep.subr.mxu0 0.0
        %666 = vmatpush1.xpose.msra.mxu0 0.0
        %667 = vmatprep.subr.mxu0 0.0
        %668 = vmatpush1.xpose.msra.mxu0 0.0
        %669 = vmatprep.subr.mxu0 0.0
        %670 = vmatpush1.xpose.msra.mxu0 0.0
        %671 = vmatprep.subr.mxu0 0.0
        %672 = vmatpush1.xpose.msra.mxu0 0.0
        %673 = vmatprep.subr.mxu0 0.0
        %674 = vmatpush1.xpose.msra.mxu0 0.0
        %675 = vmatprep.subr.mxu0 0.0
        %676 = vmatpush1.xpose.msra.mxu0 0.0
        %677 = vmatprep.subr.mxu0 0.0
        %678 = vmatpush1.xpose.msra.mxu0 0.0
        %679 = vmatprep.mubr.f32.mxu0 0.0
        %680 = vmatmul.mubr.f32.gmra.mrb[0].mxu0 %v611
        %v681 = vpop.f32.mrb[0].mxu0
        %v682 = vadd.f32 0.0, %v681
        %v683 = vpop.f32.mrb[0].mxu0
        %684 = vdwg.mxu0
        %686 = vrot.lane.b32.xlu0 %v605, 96
        %v687 = vpop.permute.xlu0 %686
        %v688 = vsel %vm526, %v605, 0
        %v690 = vsel %vm526, %v687, 0
        %692 = vmatprep.subr.mxu0 0.0
        %693 = vmatpush1.xpose.msra.mxu0 %v690
        %694 = vmatprep.subr.mxu0 0.0
        %695 = vmatpush1.xpose.msra.mxu0 0.0
        %696 = vmatprep.subr.mxu0 0.0
        %697 = vmatpush1.xpose.msra.mxu0 0.0
        %698 = vmatprep.subr.mxu0 0.0
        %699 = vmatpush1.xpose.msra.mxu0 0.0
        %700 = vmatprep.subr.mxu0 0.0
        %701 = vmatpush1.xpose.msra.mxu0 0.0
        %702 = vmatprep.subr.mxu0 0.0
        %703 = vmatpush1.xpose.msra.mxu0 0.0
        %704 = vmatprep.subr.mxu0 0.0
        %705 = vmatpush1.xpose.msra.mxu0 0.0
        %706 = vmatprep.subr.mxu0 0.0
        %707 = vmatpush1.xpose.msra.mxu0 0.0
        %708 = vmatprep.subr.mxu0 0.0
        %709 = vmatpush1.xpose.msra.mxu0 0.0
        %710 = vmatprep.subr.mxu0 0.0
        %711 = vmatpush1.xpose.msra.mxu0 0.0
        %712 = vmatprep.subr.mxu0 0.0
        %713 = vmatpush1.xpose.msra.mxu0 0.0
        %714 = vmatprep.subr.mxu0 0.0
        %715 = vmatpush1.xpose.msra.mxu0 0.0
        %716 = vmatprep.subr.mxu0 0.0
        %717 = vmatpush1.xpose.msra.mxu0 0.0
        %718 = vmatprep.subr.mxu0 0.0
        %719 = vmatpush1.xpose.msra.mxu0 0.0
        %720 = vmatprep.subr.mxu0 0.0
        %721 = vmatpush1.xpose.msra.mxu0 0.0
        %722 = vmatprep.subr.mxu0 0.0
        %723 = vmatpush1.xpose.msra.mxu0 0.0
        %724 = vmatprep.subr.mxu0 0.0
        %725 = vmatpush1.xpose.msra.mxu0 0.0
        %726 = vmatprep.subr.mxu0 0.0
        %727 = vmatpush1.xpose.msra.mxu0 0.0
        %728 = vmatprep.subr.mxu0 0.0
        %729 = vmatpush1.xpose.msra.mxu0 0.0
        %730 = vmatprep.subr.mxu0 0.0
        %731 = vmatpush1.xpose.msra.mxu0 0.0
        %732 = vmatprep.subr.mxu0 0.0
        %733 = vmatpush1.xpose.msra.mxu0 0.0
        %734 = vmatprep.subr.mxu0 0.0
        %735 = vmatpush1.xpose.msra.mxu0 0.0
        %736 = vmatprep.subr.mxu0 0.0
        %737 = vmatpush1.xpose.msra.mxu0 0.0
        %738 = vmatprep.subr.mxu0 0.0
        %739 = vmatpush1.xpose.msra.mxu0 0.0
        %740 = vmatprep.subr.mxu0 0.0
        %741 = vmatpush1.xpose.msra.mxu0 0.0
        %742 = vmatprep.subr.mxu0 0.0
        %743 = vmatpush1.xpose.msra.mxu0 0.0
        %744 = vmatprep.subr.mxu0 0.0
        %745 = vmatpush1.xpose.msra.mxu0 0.0
        %746 = vmatprep.subr.mxu0 0.0
        %747 = vmatpush1.xpose.msra.mxu0 0.0
        %748 = vmatprep.subr.mxu0 0.0
        %749 = vmatpush1.xpose.msra.mxu0 0.0
        %750 = vmatprep.subr.mxu0 0.0
        %751 = vmatpush1.xpose.msra.mxu0 0.0
        %752 = vmatprep.subr.mxu0 0.0
        %753 = vmatpush1.xpose.msra.mxu0 0.0
        %754 = vmatprep.subr.mxu0 0.0
        %755 = vmatpush1.xpose.msra.mxu0 0.0
        %756 = vmatprep.mubr.f32.mxu0 0.0
        %757 = vmatmul.mubr.f32.gmra.mrb[0].mxu0 %v688
        %v758 = vpop.f32.mrb[0].mxu0
        %v759 = vadd.f32 0.0, %v758
        %v760 = vpop.f32.mrb[0].mxu0
        %761 = vdwg.mxu0
        %v762 = vmul.f32 %v682, 0.17677669
        %v763 = vmul.f32 %v759, 0.17677669
        %v764 = vadd.f32 %v762, 0.0
        %v765 = vadd.f32 %v763, 0.0
        %vm766 = vcmask 64512
        %v767 = vsel %vm766, %v764, -inf
        %768 = vmax.xlane.f32.xlu0 %v767
        %v769 = vpop.xlane.xlu0 %768
        %v770 = vsel %vm766, %v765, -inf
        %771 = vmax.xlane.f32.xlu0 %v770
        %v772 = vpop.xlane.xlu0 %771
        %v773 = vsub.f32 %v764, %v769
        %v774 = vsub.f32 %v765, %v772
        %v775 = vmul.f32 %v773, 1.442695
        %v776 = vpow.pop %v775
        %v777 = vmul.f32 %v774, 1.442695
        %v778 = vpow.pop %v777
        %v779 = vsel %vm766, %v776, 0.0
        %780 = vadd.xlane.f32.xlu0 %v779
        %v781 = vpop.xlane.xlu0 %780
        %v782 = vsel %vm766, %v778, 0.0
        %783 = vadd.xlane.f32.xlu0 %v782
        %v784 = vpop.xlane.xlu0 %783
        %v785 = vrcp.pop %v781
        %v786 = vrcp.pop %v784
        %v787 = vmul.f32 %v776, %v785
        %v788 = vmul.f32 %v778, %v786
        %789 = vrot.lane.b32.xlu0 %v600, 64
        %v790 = vpop.permute.xlu0 %789
        %v793 = vsel %vm766, %v787, 0
        %795 = vmatprep.subr.mxu0 0.0
        %796 = vmatpush1.msra.mxu0 %v790
        %797 = vmatprep.subr.mxu0 0.0
        %798 = vmatpush1.msra.mxu0 0.0
        %799 = vmatprep.subr.mxu0 0.0
        %800 = vmatpush1.msra.mxu0 0.0
        %801 = vmatprep.subr.mxu0 0.0
        %802 = vmatpush1.msra.mxu0 0.0
        %803 = vmatprep.subr.mxu0 0.0
        %804 = vmatpush1.msra.mxu0 0.0
        %805 = vmatprep.subr.mxu0 0.0
        %806 = vmatpush1.msra.mxu0 0.0
        %807 = vmatprep.subr.mxu0 0.0
        %808 = vmatpush1.msra.mxu0 0.0
        %809 = vmatprep.subr.mxu0 0.0
        %810 = vmatpush1.msra.mxu0 0.0
        %811 = vmatprep.subr.mxu0 0.0
        %812 = vmatpush1.msra.mxu0 0.0
        %813 = vmatprep.subr.mxu0 0.0
        %814 = vmatpush1.msra.mxu0 0.0
        %815 = vmatprep.subr.mxu0 0.0
        %816 = vmatpush1.msra.mxu0 0.0
        %817 = vmatprep.subr.mxu0 0.0
        %818 = vmatpush1.msra.mxu0 0.0
        %819 = vmatprep.subr.mxu0 0.0
        %820 = vmatpush1.msra.mxu0 0.0
        %821 = vmatprep.subr.mxu0 0.0
        %822 = vmatpush1.msra.mxu0 0.0
        %823 = vmatprep.subr.mxu0 0.0
        %824 = vmatpush1.msra.mxu0 0.0
        %825 = vmatprep.subr.mxu0 0.0
        %826 = vmatpush1.msra.mxu0 0.0
        %827 = vmatprep.subr.mxu0 0.0
        %828 = vmatpush1.msra.mxu0 0.0
        %829 = vmatprep.subr.mxu0 0.0
        %830 = vmatpush1.msra.mxu0 0.0
        %831 = vmatprep.subr.mxu0 0.0
        %832 = vmatpush1.msra.mxu0 0.0
        %833 = vmatprep.subr.mxu0 0.0
        %834 = vmatpush1.msra.mxu0 0.0
        %835 = vmatprep.subr.mxu0 0.0
        %836 = vmatpush1.msra.mxu0 0.0
        %837 = vmatprep.subr.mxu0 0.0
        %838 = vmatpush1.msra.mxu0 0.0
        %839 = vmatprep.subr.mxu0 0.0
        %840 = vmatpush1.msra.mxu0 0.0
        %841 = vmatprep.subr.mxu0 0.0
        %842 = vmatpush1.msra.mxu0 0.0
        %843 = vmatprep.subr.mxu0 0.0
        %844 = vmatpush1.msra.mxu0 0.0
        %845 = vmatprep.subr.mxu0 0.0
        %846 = vmatpush1.msra.mxu0 0.0
        %847 = vmatprep.subr.mxu0 0.0
        %848 = vmatpush1.msra.mxu0 0.0
        %849 = vmatprep.subr.mxu0 0.0
        %850 = vmatpush1.msra.mxu0 0.0
        %851 = vmatprep.subr.mxu0 0.0
        %852 = vmatpush1.msra.mxu0 0.0
        %853 = vmatprep.subr.mxu0 0.0
        %854 = vmatpush1.msra.mxu0 0.0
        %855 = vmatprep.subr.mxu0 0.0
        %856 = vmatpush1.msra.mxu0 0.0
        %857 = vmatprep.subr.mxu0 0.0
        %858 = vmatpush1.msra.mxu0 0.0
        %859 = vmatprep.mubr.f32.mxu0 0.0
        %860 = vmatmul.mubr.f32.gmra.mrb[0].mxu0 %v793
        %v861 = vpop.f32.mrb[0].mxu0
        %v862 = vadd.f32 0.0, %v861
        %v863 = vpop.f32.mrb[0].mxu0
        %864 = vdwg.mxu0
        %865 = vrot.lane.b32.xlu0 %v605, 64
        %v866 = vpop.permute.xlu0 %865
        %v869 = vsel %vm766, %v788, 0
        %871 = vmatprep.subr.mxu0 0.0
        %872 = vmatpush1.msra.mxu0 %v866
        %873 = vmatprep.subr.mxu0 0.0
        %874 = vmatpush1.msra.mxu0 0.0
        %875 = vmatprep.subr.mxu0 0.0
        %876 = vmatpush1.msra.mxu0 0.0
        %877 = vmatprep.subr.mxu0 0.0
        %878 = vmatpush1.msra.mxu0 0.0
        %879 = vmatprep.subr.mxu0 0.0
        %880 = vmatpush1.msra.mxu0 0.0
        %881 = vmatprep.subr.mxu0 0.0
        %882 = vmatpush1.msra.mxu0 0.0
        %883 = vmatprep.subr.mxu0 0.0
        %884 = vmatpush1.msra.mxu0 0.0
        %885 = vmatprep.subr.mxu0 0.0
        %886 = vmatpush1.msra.mxu0 0.0
        %887 = vmatprep.subr.mxu0 0.0
        %888 = vmatpush1.msra.mxu0 0.0
        %889 = vmatprep.subr.mxu0 0.0
        %890 = vmatpush1.msra.mxu0 0.0
        %891 = vmatprep.subr.mxu0 0.0
        %892 = vmatpush1.msra.mxu0 0.0
        %893 = vmatprep.subr.mxu0 0.0
        %894 = vmatpush1.msra.mxu0 0.0
        %895 = vmatprep.subr.mxu0 0.0
        %896 = vmatpush1.msra.mxu0 0.0
        %897 = vmatprep.subr.mxu0 0.0
        %898 = vmatpush1.msra.mxu0 0.0
        %899 = vmatprep.subr.mxu0 0.0
        %900 = vmatpush1.msra.mxu0 0.0
        %901 = vmatprep.subr.mxu0 0.0
        %902 = vmatpush1.msra.mxu0 0.0
        %903 = vmatprep.subr.mxu0 0.0
        %904 = vmatpush1.msra.mxu0 0.0
        %905 = vmatprep.subr.mxu0 0.0
        %906 = vmatpush1.msra.mxu0 0.0
        %907 = vmatprep.subr.mxu0 0.0
        %908 = vmatpush1.msra.mxu0 0.0
        %909 = vmatprep.subr.mxu0 0.0
        %910 = vmatpush1.msra.mxu0 0.0
        %911 = vmatprep.subr.mxu0 0.0
        %912 = vmatpush1.msra.mxu0 0.0
        %913 = vmatprep.subr.mxu0 0.0
        %914 = vmatpush1.msra.mxu0 0.0
        %915 = vmatprep.subr.mxu0 0.0
        %916 = vmatpush1.msra.mxu0 0.0
        %917 = vmatprep.subr.mxu0 0.0
        %918 = vmatpush1.msra.mxu0 0.0
        %919 = vmatprep.subr.mxu0 0.0
        %920 = vmatpush1.msra.mxu0 0.0
        %921 = vmatprep.subr.mxu0 0.0
        %922 = vmatpush1.msra.mxu0 0.0
        %923 = vmatprep.subr.mxu0 0.0
        %924 = vmatpush1.msra.mxu0 0.0
        %925 = vmatprep.subr.mxu0 0.0
        %926 = vmatpush1.msra.mxu0 0.0
        %927 = vmatprep.subr.mxu0 0.0
        %928 = vmatpush1.msra.mxu0 0.0
        %929 = vmatprep.subr.mxu0 0.0
        %930 = vmatpush1.msra.mxu0 0.0
        %931 = vmatprep.subr.mxu0 0.0
        %932 = vmatpush1.msra.mxu0 0.0
        %933 = vmatprep.subr.mxu0 0.0
        %934 = vmatpush1.msra.mxu0 0.0
        %935 = vmatprep.mubr.f32.mxu0 0.0
        %936 = vmatmul.mubr.f32.gmra.mrb[0].mxu0 %v869
        %v937 = vpop.f32.mrb[0].mxu0
        %v938 = vadd.f32 0.0, %v937
        %v939 = vpop.f32.mrb[0].mxu0
        %940 = vdwg.mxu0
        %v942 = vsel %vm526, %v862, 0
        %944 = vmatprep.subr.mxu0 0.0
        %945 = vmatpush1.xpose.msra.mxu0 %v613
        %946 = vmatprep.subr.mxu0 0.0
        %947 = vmatpush1.xpose.msra.mxu0 0.0
        %948 = vmatprep.subr.mxu0 0.0
        %949 = vmatpush1.xpose.msra.mxu0 0.0
        %950 = vmatprep.subr.mxu0 0.0
        %951 = vmatpush1.xpose.msra.mxu0 0.0
        %952 = vmatprep.subr.mxu0 0.0
        %953 = vmatpush1.xpose.msra.mxu0 0.0
        %954 = vmatprep.subr.mxu0 0.0
        %955 = vmatpush1.xpose.msra.mxu0 0.0
        %956 = vmatprep.subr.mxu0 0.0
        %957 = vmatpush1.xpose.msra.mxu0 0.0
        %958 = vmatprep.subr.mxu0 0.0
        %959 = vmatpush1.xpose.msra.mxu0 0.0
        %960 = vmatprep.subr.mxu0 0.0
        %961 = vmatpush1.xpose.msra.mxu0 0.0
        %962 = vmatprep.subr.mxu0 0.0
        %963 = vmatpush1.xpose.msra.mxu0 0.0
        %964 = vmatprep.subr.mxu0 0.0
        %965 = vmatpush1.xpose.msra.mxu0 0.0
        %966 = vmatprep.subr.mxu0 0.0
        %967 = vmatpush1.xpose.msra.mxu0 0.0
        %968 = vmatprep.subr.mxu0 0.0
        %969 = vmatpush1.xpose.msra.mxu0 0.0
        %970 = vmatprep.subr.mxu0 0.0
        %971 = vmatpush1.xpose.msra.mxu0 0.0
        %972 = vmatprep.subr.mxu0 0.0
        %973 = vmatpush1.xpose.msra.mxu0 0.0
        %974 = vmatprep.subr.mxu0 0.0
        %975 = vmatpush1.xpose.msra.mxu0 0.0
        %976 = vmatprep.subr.mxu0 0.0
        %977 = vmatpush1.xpose.msra.mxu0 0.0
        %978 = vmatprep.subr.mxu0 0.0
        %979 = vmatpush1.xpose.msra.mxu0 0.0
        %980 = vmatprep.subr.mxu0 0.0
        %981 = vmatpush1.xpose.msra.mxu0 0.0
        %982 = vmatprep.subr.mxu0 0.0
        %983 = vmatpush1.xpose.msra.mxu0 0.0
        %984 = vmatprep.subr.mxu0 0.0
        %985 = vmatpush1.xpose.msra.mxu0 0.0
        %986 = vmatprep.subr.mxu0 0.0
        %987 = vmatpush1.xpose.msra.mxu0 0.0
        %988 = vmatprep.subr.mxu0 0.0
        %989 = vmatpush1.xpose.msra.mxu0 0.0
        %990 = vmatprep.subr.mxu0 0.0
        %991 = vmatpush1.xpose.msra.mxu0 0.0
        %992 = vmatprep.subr.mxu0 0.0
        %993 = vmatpush1.xpose.msra.mxu0 0.0
        %994 = vmatprep.subr.mxu0 0.0
        %995 = vmatpush1.xpose.msra.mxu0 0.0
        %996 = vmatprep.subr.mxu0 0.0
        %997 = vmatpush1.xpose.msra.mxu0 0.0
        %998 = vmatprep.subr.mxu0 0.0
        %999 = vmatpush1.xpose.msra.mxu0 0.0
        %1000 = vmatprep.subr.mxu0 0.0
        %1001 = vmatpush1.xpose.msra.mxu0 0.0
        %1002 = vmatprep.subr.mxu0 0.0
        %1003 = vmatpush1.xpose.msra.mxu0 0.0
        %1004 = vmatprep.subr.mxu0 0.0
        %1005 = vmatpush1.xpose.msra.mxu0 0.0
        %1006 = vmatprep.subr.mxu0 0.0
        %1007 = vmatpush1.xpose.msra.mxu0 0.0
        %1008 = vmatprep.mubr.f32.mxu0 0.0
        %1009 = vmatmul.mubr.f32.gmra.mrb[0].mxu0 %v942
        %v1010 = vpop.f32.mrb[0].mxu0
        %v1011 = vadd.f32 0.0, %v1010
        %v1012 = vpop.f32.mrb[0].mxu0
        %1013 = vdwg.mxu0
        %v1015 = vsel %vm526, %v938, 0
        %1017 = vmatprep.subr.mxu0 0.0
        %1018 = vmatpush1.xpose.msra.mxu0 %v690
        %1019 = vmatprep.subr.mxu0 0.0
        %1020 = vmatpush1.xpose.msra.mxu0 0.0
        %1021 = vmatprep.subr.mxu0 0.0
        %1022 = vmatpush1.xpose.msra.mxu0 0.0
        %1023 = vmatprep.subr.mxu0 0.0
        %1024 = vmatpush1.xpose.msra.mxu0 0.0
        %1025 = vmatprep.subr.mxu0 0.0
        %1026 = vmatpush1.xpose.msra.mxu0 0.0
        %1027 = vmatprep.subr.mxu0 0.0
        %1028 = vmatpush1.xpose.msra.mxu0 0.0
        %1029 = vmatprep.subr.mxu0 0.0
        %1030 = vmatpush1.xpose.msra.mxu0 0.0
        %1031 = vmatprep.subr.mxu0 0.0
        %1032 = vmatpush1.xpose.msra.mxu0 0.0
        %1033 = vmatprep.subr.mxu0 0.0
        %1034 = vmatpush1.xpose.msra.mxu0 0.0
        %1035 = vmatprep.subr.mxu0 0.0
        %1036 = vmatpush1.xpose.msra.mxu0 0.0
        %1037 = vmatprep.subr.mxu0 0.0
        %1038 = vmatpush1.xpose.msra.mxu0 0.0
        %1039 = vmatprep.subr.mxu0 0.0
        %1040 = vmatpush1.xpose.msra.mxu0 0.0
        %1041 = vmatprep.subr.mxu0 0.0
        %1042 = vmatpush1.xpose.msra.mxu0 0.0
        %1043 = vmatprep.subr.mxu0 0.0
        %1044 = vmatpush1.xpose.msra.mxu0 0.0
        %1045 = vmatprep.subr.mxu0 0.0
        %1046 = vmatpush1.xpose.msra.mxu0 0.0
        %1047 = vmatprep.subr.mxu0 0.0
        %1048 = vmatpush1.xpose.msra.mxu0 0.0
        %1049 = vmatprep.subr.mxu0 0.0
        %1050 = vmatpush1.xpose.msra.mxu0 0.0
        %1051 = vmatprep.subr.mxu0 0.0
        %1052 = vmatpush1.xpose.msra.mxu0 0.0
        %1053 = vmatprep.subr.mxu0 0.0
        %1054 = vmatpush1.xpose.msra.mxu0 0.0
        %1055 = vmatprep.subr.mxu0 0.0
        %1056 = vmatpush1.xpose.msra.mxu0 0.0
        %1057 = vmatprep.subr.mxu0 0.0
        %1058 = vmatpush1.xpose.msra.mxu0 0.0
        %1059 = vmatprep.subr.mxu0 0.0
        %1060 = vmatpush1.xpose.msra.mxu0 0.0
        %1061 = vmatprep.subr.mxu0 0.0
        %1062 = vmatpush1.xpose.msra.mxu0 0.0
        %1063 = vmatprep.subr.mxu0 0.0
        %1064 = vmatpush1.xpose.msra.mxu0 0.0
        %1065 = vmatprep.subr.mxu0 0.0
        %1066 = vmatpush1.xpose.msra.mxu0 0.0
        %1067 = vmatprep.subr.mxu0 0.0
        %1068 = vmatpush1.xpose.msra.mxu0 0.0
        %1069 = vmatprep.subr.mxu0 0.0
        %1070 = vmatpush1.xpose.msra.mxu0 0.0
        %1071 = vmatprep.subr.mxu0 0.0
        %1072 = vmatpush1.xpose.msra.mxu0 0.0
        %1073 = vmatprep.subr.mxu0 0.0
        %1074 = vmatpush1.xpose.msra.mxu0 0.0
        %1075 = vmatprep.subr.mxu0 0.0
        %1076 = vmatpush1.xpose.msra.mxu0 0.0
        %1077 = vmatprep.subr.mxu0 0.0
        %1078 = vmatpush1.xpose.msra.mxu0 0.0
        %1079 = vmatprep.subr.mxu0 0.0
        %1080 = vmatpush1.xpose.msra.mxu0 0.0
        %1081 = vmatprep.mubr.f32.mxu0 0.0
        %1082 = vmatmul.mubr.f32.gmra.mrb[0].mxu0 %v1015
        %v1083 = vpop.f32.mrb[0].mxu0
        %v1084 = vadd.f32 0.0, %v1083
        %v1085 = vpop.f32.mrb[0].mxu0
        %1086 = vdwg.mxu0
        %v1087 = vmul.f32 %v1011, 0.17677669
        %v1088 = vmul.f32 %v1084, 0.17677669
        %v1089 = vadd.f32 %v1087, 0.0
        %v1090 = vadd.f32 %v1088, 0.0
        %v1091 = vadd.f32 %v762, %v1089
        %v1092 = vadd.f32 %v763, %v1090
        %v1093 = vsel %vm766, %v1091, -inf
        %1094 = vmax.xlane.f32.xlu0 %v1093
        %v1095 = vpop.xlane.xlu0 %1094
        %v1096 = vsel %vm766, %v1092, -inf
        %1097 = vmax.xlane.f32.xlu0 %v1096
        %v1098 = vpop.xlane.xlu0 %1097
        %v1099 = vsub.f32 %v1091, %v1095
        %v1100 = vsub.f32 %v1092, %v1098
        %v1101 = vmul.f32 %v1099, 1.442695
        %v1102 = vpow.pop %v1101
        %v1103 = vmul.f32 %v1100, 1.442695
        %v1104 = vpow.pop %v1103
        %v1105 = vsel %vm766, %v1102, 0.0
        %1106 = vadd.xlane.f32.xlu0 %v1105
        %v1107 = vpop.xlane.xlu0 %1106
        %v1108 = vsel %vm766, %v1104, 0.0
        %1109 = vadd.xlane.f32.xlu0 %v1108
        %v1110 = vpop.xlane.xlu0 %1109
        %v1111 = vrcp.pop %v1107
        %v1112 = vrcp.pop %v1110
        %v1113 = vmul.f32 %v1102, %v1111
        %v1114 = vmul.f32 %v1104, %v1112
        %v1116 = vsel %vm766, %v1113, 0
        %1118 = vmatprep.subr.mxu0 0.0
        %1119 = vmatpush1.msra.mxu0 %v790
        %1120 = vmatprep.subr.mxu0 0.0
        %1121 = vmatpush1.msra.mxu0 0.0
        %1122 = vmatprep.subr.mxu0 0.0
        %1123 = vmatpush1.msra.mxu0 0.0
        %1124 = vmatprep.subr.mxu0 0.0
        %1125 = vmatpush1.msra.mxu0 0.0
        %1126 = vmatprep.subr.mxu0 0.0
        %1127 = vmatpush1.msra.mxu0 0.0
        %1128 = vmatprep.subr.mxu0 0.0
        %1129 = vmatpush1.msra.mxu0 0.0
        %1130 = vmatprep.subr.mxu0 0.0
        %1131 = vmatpush1.msra.mxu0 0.0
        %1132 = vmatprep.subr.mxu0 0.0
        %1133 = vmatpush1.msra.mxu0 0.0
        %1134 = vmatprep.subr.mxu0 0.0
        %1135 = vmatpush1.msra.mxu0 0.0
        %1136 = vmatprep.subr.mxu0 0.0
        %1137 = vmatpush1.msra.mxu0 0.0
        %1138 = vmatprep.subr.mxu0 0.0
        %1139 = vmatpush1.msra.mxu0 0.0
        %1140 = vmatprep.subr.mxu0 0.0
        %1141 = vmatpush1.msra.mxu0 0.0
        %1142 = vmatprep.subr.mxu0 0.0
        %1143 = vmatpush1.msra.mxu0 0.0
        %1144 = vmatprep.subr.mxu0 0.0
        %1145 = vmatpush1.msra.mxu0 0.0
        %1146 = vmatprep.subr.mxu0 0.0
        %1147 = vmatpush1.msra.mxu0 0.0
        %1148 = vmatprep.subr.mxu0 0.0
        %1149 = vmatpush1.msra.mxu0 0.0
        %1150 = vmatprep.subr.mxu0 0.0
        %1151 = vmatpush1.msra.mxu0 0.0
        %1152 = vmatprep.subr.mxu0 0.0
        %1153 = vmatpush1.msra.mxu0 0.0
        %1154 = vmatprep.subr.mxu0 0.0
        %1155 = vmatpush1.msra.mxu0 0.0
        %1156 = vmatprep.subr.mxu0 0.0
        %1157 = vmatpush1.msra.mxu0 0.0
        %1158 = vmatprep.subr.mxu0 0.0
        %1159 = vmatpush1.msra.mxu0 0.0
        %1160 = vmatprep.subr.mxu0 0.0
        %1161 = vmatpush1.msra.mxu0 0.0
        %1162 = vmatprep.subr.mxu0 0.0
        %1163 = vmatpush1.msra.mxu0 0.0
        %1164 = vmatprep.subr.mxu0 0.0
        %1165 = vmatpush1.msra.mxu0 0.0
        %1166 = vmatprep.subr.mxu0 0.0
        %1167 = vmatpush1.msra.mxu0 0.0
        %1168 = vmatprep.subr.mxu0 0.0
        %1169 = vmatpush1.msra.mxu0 0.0
        %1170 = vmatprep.subr.mxu0 0.0
        %1171 = vmatpush1.msra.mxu0 0.0
        %1172 = vmatprep.subr.mxu0 0.0
        %1173 = vmatpush1.msra.mxu0 0.0
        %1174 = vmatprep.subr.mxu0 0.0
        %1175 = vmatpush1.msra.mxu0 0.0
        %1176 = vmatprep.subr.mxu0 0.0
        %1177 = vmatpush1.msra.mxu0 0.0
        %1178 = vmatprep.subr.mxu0 0.0
        %1179 = vmatpush1.msra.mxu0 0.0
        %1180 = vmatprep.subr.mxu0 0.0
        %1181 = vmatpush1.msra.mxu0 0.0
        %1182 = vmatprep.mubr.f32.mxu0 0.0
        %1183 = vmatmul.mubr.f32.gmra.mrb[0].mxu0 %v1116
        %v1184 = vpop.f32.mrb[0].mxu0
        %v1185 = vadd.f32 0.0, %v1184
        %v1186 = vpop.f32.mrb[0].mxu0
        %1187 = vdwg.mxu0
        %v1189 = vsel %vm766, %v1114, 0
        %1191 = vmatprep.subr.mxu0 0.0
        %1192 = vmatpush1.msra.mxu0 %v866
        %1193 = vmatprep.subr.mxu0 0.0
        %1194 = vmatpush1.msra.mxu0 0.0
        %1195 = vmatprep.subr.mxu0 0.0
        %1196 = vmatpush1.msra.mxu0 0.0
        %1197 = vmatprep.subr.mxu0 0.0
        %1198 = vmatpush1.msra.mxu0 0.0
        %1199 = vmatprep.subr.mxu0 0.0
        %1200 = vmatpush1.msra.mxu0 0.0
        %1201 = vmatprep.subr.mxu0 0.0
        %1202 = vmatpush1.msra.mxu0 0.0
        %1203 = vmatprep.subr.mxu0 0.0
        %1204 = vmatpush1.msra.mxu0 0.0
        %1205 = vmatprep.subr.mxu0 0.0
        %1206 = vmatpush1.msra.mxu0 0.0
        %1207 = vmatprep.subr.mxu0 0.0
        %1208 = vmatpush1.msra.mxu0 0.0
        %1209 = vmatprep.subr.mxu0 0.0
        %1210 = vmatpush1.msra.mxu0 0.0
        %1211 = vmatprep.subr.mxu0 0.0
        %1212 = vmatpush1.msra.mxu0 0.0
        %1213 = vmatprep.subr.mxu0 0.0
        %1214 = vmatpush1.msra.mxu0 0.0
        %1215 = vmatprep.subr.mxu0 0.0
        %1216 = vmatpush1.msra.mxu0 0.0
        %1217 = vmatprep.subr.mxu0 0.0
        %1218 = vmatpush1.msra.mxu0 0.0
        %1219 = vmatprep.subr.mxu0 0.0
        %1220 = vmatpush1.msra.mxu0 0.0
        %1221 = vmatprep.subr.mxu0 0.0
        %1222 = vmatpush1.msra.mxu0 0.0
        %1223 = vmatprep.subr.mxu0 0.0
        %1224 = vmatpush1.msra.mxu0 0.0
        %1225 = vmatprep.subr.mxu0 0.0
        %1226 = vmatpush1.msra.mxu0 0.0
        %1227 = vmatprep.subr.mxu0 0.0
        %1228 = vmatpush1.msra.mxu0 0.0
        %1229 = vmatprep.subr.mxu0 0.0
        %1230 = vmatpush1.msra.mxu0 0.0
        %1231 = vmatprep.subr.mxu0 0.0
        %1232 = vmatpush1.msra.mxu0 0.0
        %1233 = vmatprep.subr.mxu0 0.0
        %1234 = vmatpush1.msra.mxu0 0.0
        %1235 = vmatprep.subr.mxu0 0.0
        %1236 = vmatpush1.msra.mxu0 0.0
        %1237 = vmatprep.subr.mxu0 0.0
        %1238 = vmatpush1.msra.mxu0 0.0
        %1239 = vmatprep.subr.mxu0 0.0
        %1240 = vmatpush1.msra.mxu0 0.0
        %1241 = vmatprep.subr.mxu0 0.0
        %1242 = vmatpush1.msra.mxu0 0.0
        %1243 = vmatprep.subr.mxu0 0.0
        %1244 = vmatpush1.msra.mxu0 0.0
        %1245 = vmatprep.subr.mxu0 0.0
        %1246 = vmatpush1.msra.mxu0 0.0
        %1247 = vmatprep.subr.mxu0 0.0
        %1248 = vmatpush1.msra.mxu0 0.0
        %1249 = vmatprep.subr.mxu0 0.0
        %1250 = vmatpush1.msra.mxu0 0.0
        %1251 = vmatprep.subr.mxu0 0.0
        %1252 = vmatpush1.msra.mxu0 0.0
        %1253 = vmatprep.subr.mxu0 0.0
        %1254 = vmatpush1.msra.mxu0 0.0
        %1255 = vmatprep.mubr.f32.mxu0 0.0
        %1256 = vmatmul.mubr.f32.gmra.mrb[0].mxu0 %v1189
        %v1257 = vpop.f32.mrb[0].mxu0
        %v1258 = vadd.f32 0.0, %v1257
        %v1259 = vpop.f32.mrb[0].mxu0
        %1260 = vdwg.mxu0
        %s1261 = sld [smem:[#allocation3 + %s24]]
        %v1262 = vstv %s1261
        %v1263 = vmul.f32 %v1262, %v1185
        %v1264 = vmul.f32 %v1262, %v1258
        %v1265 = vadd.f32 %v520, %v1263
        %v1266 = vadd.f32 %v521, %v1264
        %v1267 = vld [vmem:[%s501] sm:$0x1]
        %v1268 = vld [vmem:[%s504] sm:$0x1]
        %v1269 = vsel %vm526, %v1265, 0.0
        %1270 = vadd.xlane.f32.xlu0 %v1269
        %v1271 = vpop.xlane.xlu0 %1270
        %v1272 = vsel %vm526, %v1266, 0.0
        %1273 = vadd.xlane.f32.xlu0 %v1272
        %v1274 = vpop.xlane.xlu0 %1273
        %v1275 = vrcp.pop 32.0
        %v1276 = vmul.f32 %v1271, %v1275
        %v1277 = vmul.f32 %v1274, %v1275
        %v1278 = vsub.f32 %v1265, %v1276
        %v1279 = vsub.f32 %v1266, %v1277
        %v1280 = vmul.f32 %v1278, %v1278
        %v1281 = vmul.f32 %v1279, %v1279
        %v1282 = vsel %vm526, %v1280, 0.0
        %1283 = vadd.xlane.f32.xlu0 %v1282
        %v1284 = vpop.xlane.xlu0 %1283
        %v1285 = vsel %vm526, %v1281, 0.0
        %1286 = vadd.xlane.f32.xlu0 %v1285
        %v1287 = vpop.xlane.xlu0 %1286
        %v1288 = vmul.f32 %v1284, %v1275
        %v1289 = vmul.f32 %v1287, %v1275
        %v1290 = vadd.f32 %v1288, 1e-05
        %v1291 = vadd.f32 %v1289, 1e-05
        %v1292 = vrsqrt.pop %v1290
        %v1293 = vrsqrt.pop %v1291
        %v1294 = vmul.f32 %v1278, %v1292
        %v1295 = vmul.f32 %v1279, %v1293
        %v1297 = vlaneseq
        %v1298 = vshrl.u32 %v1297, 7
        %v1299 = vsub.s32 0, %v1298
        %v1300 = vrot.slane %v1267, %v1299
        %v1302 = vmul.f32 %v1294, %v1300
        %v1303 = vmul.f32 %v1295, %v1300
        %v1305 = vlaneseq
        %v1306 = vshrl.u32 %v1305, 7
        %v1307 = vsub.s32 0, %v1306
        %v1308 = vrot.slane %v1268, %v1307
        %v1310 = vadd.f32 %v1302, %v1308
        %v1311 = vadd.f32 %v1303, %v1308
        %v1312 = vld [vmem:[%s487] sm:$0xff]
        %v1313 = vld [vmem:[%s487 + $0x8] sm:$0xff]
        %v1314 = vld [vmem:[%s487 + $0x10] sm:$0xff]
        %v1315 = vld [vmem:[%s487 + $0x18] sm:$0xff]
        %v1316 = vld [vmem:[%s490] sm:$0x1]
        %v1318 = vlaneseq
        %v1319 = vshrl.u32 %v1318, 7
        %v1320 = vsub.s32 0, %v1319
        %v1321 = vrot.slane %v1316, %v1320
        %v1324 = vsel %vm526, %v1310, 0
        %v1327 = vsel %vm526, %v1311, 0
        %1329 = vmatprep.subr.mxu0 0.0
        %1330 = vmatpush1.msra.mxu0 %v1312
        %1331 = vmatprep.subr.mxu0 0.0
        %1332 = vmatpush1.msra.mxu0 %v1313
        %1333 = vmatprep.subr.mxu0 0.0
        %1334 = vmatpush1.msra.mxu0 %v1314
        %1335 = vmatprep.subr.mxu0 0.0
        %1336 = vmatpush1.msra.mxu0 %v1315
        %1337 = vmatprep.subr.mxu0 0.0
        %1338 = vmatpush1.msra.mxu0 0.0
        %1339 = vmatprep.subr.mxu0 0.0
        %1340 = vmatpush1.msra.mxu0 0.0
        %1341 = vmatprep.subr.mxu0 0.0
        %1342 = vmatpush1.msra.mxu0 0.0
        %1343 = vmatprep.subr.mxu0 0.0
        %1344 = vmatpush1.msra.mxu0 0.0
        %1345 = vmatprep.subr.mxu0 0.0
        %1346 = vmatpush1.msra.mxu0 0.0
        %1347 = vmatprep.subr.mxu0 0.0
        %1348 = vmatpush1.msra.mxu0 0.0
        %1349 = vmatprep.subr.mxu0 0.0
        %1350 = vmatpush1.msra.mxu0 0.0
        %1351 = vmatprep.subr.mxu0 0.0
        %1352 = vmatpush1.msra.mxu0 0.0
        %1353 = vmatprep.subr.mxu0 0.0
        %1354 = vmatpush1.msra.mxu0 0.0
        %1355 = vmatprep.subr.mxu0 0.0
        %1356 = vmatpush1.msra.mxu0 0.0
        %1357 = vmatprep.subr.mxu0 0.0
        %1358 = vmatpush1.msra.mxu0 0.0
        %1359 = vmatprep.subr.mxu0 0.0
        %1360 = vmatpush1.msra.mxu0 0.0
        %1361 = vmatprep.subr.mxu0 0.0
        %1362 = vmatpush1.msra.mxu0 0.0
        %1363 = vmatprep.subr.mxu0 0.0
        %1364 = vmatpush1.msra.mxu0 0.0
        %1365 = vmatprep.subr.mxu0 0.0
        %1366 = vmatpush1.msra.mxu0 0.0
        %1367 = vmatprep.subr.mxu0 0.0
        %1368 = vmatpush1.msra.mxu0 0.0
        %1369 = vmatprep.subr.mxu0 0.0
        %1370 = vmatpush1.msra.mxu0 0.0
        %1371 = vmatprep.subr.mxu0 0.0
        %1372 = vmatpush1.msra.mxu0 0.0
        %1373 = vmatprep.subr.mxu0 0.0
        %1374 = vmatpush1.msra.mxu0 0.0
        %1375 = vmatprep.subr.mxu0 0.0
        %1376 = vmatpush1.msra.mxu0 0.0
        %1377 = vmatprep.subr.mxu0 0.0
        %1378 = vmatpush1.msra.mxu0 0.0
        %1379 = vmatprep.subr.mxu0 0.0
        %1380 = vmatpush1.msra.mxu0 0.0
        %1381 = vmatprep.subr.mxu0 0.0
        %1382 = vmatpush1.msra.mxu0 0.0
        %1383 = vmatprep.subr.mxu0 0.0
        %1384 = vmatpush1.msra.mxu0 0.0
        %1385 = vmatprep.subr.mxu0 0.0
        %1386 = vmatpush1.msra.mxu0 0.0
        %1387 = vmatprep.subr.mxu0 0.0
        %1388 = vmatpush1.msra.mxu0 0.0
        %1389 = vmatprep.subr.mxu0 0.0
        %1390 = vmatpush1.msra.mxu0 0.0
        %1391 = vmatprep.subr.mxu0 0.0
        %1392 = vmatpush1.msra.mxu0 0.0
        %1393 = vmatprep.mubr.f32.mxu0 0.0
        %1394 = vmatmul.mubr.f32.gmra.mrb[0].mxu0 %v1324
        %v1395 = vpop.f32.mrb[0].mxu0
        %v1396 = vadd.f32 %v1321, %v1395
        %v1397 = vpop.f32.mrb[0].mxu0
        %1398 = vmatprep.mubr.f32.mxu0 0.0
        %1399 = vmatmul.mubr.f32.gmra.mrb[0].mxu0 %v1327
        %v1400 = vpop.f32.mrb[0].mxu0
        %v1401 = vadd.f32 %v1321, %v1400
        %v1402 = vpop.f32.mrb[0].mxu0
        %1403 = vdwg.mxu0
        %v1404 = vmax.f32 %v1396, 0.0
        %v1405 = vmax.f32 %v1401, 0.0
        %v1406 = vld [vmem:[%s495] sm:$0xff]
        %v1407 = vld [vmem:[%s495 + $0x8] sm:$0xff]
        %v1408 = vld [vmem:[%s495 + $0x10] sm:$0xff]
        %v1409 = vld [vmem:[%s495 + $0x18] sm:$0xff]
        %v1410 = vld [vmem:[%s495 + $0x20] sm:$0xff]
        %v1411 = vld [vmem:[%s495 + $0x28] sm:$0xff]
        %v1412 = vld [vmem:[%s495 + $0x30] sm:$0xff]
        %v1413 = vld [vmem:[%s495 + $0x38] sm:$0xff]
        %v1414 = vld [vmem:[%s498] sm:$0x1]
        %v1416 = vlaneseq
        %v1417 = vshrl.u32 %v1416, 7
        %v1418 = vsub.s32 0, %v1417
        %v1419 = vrot.slane %v1414, %v1418
        %vm1421 = vcmask 523264
        %v1423 = vsel %vm1421, %v1404, 0
        %v1426 = vsel %vm1421, %v1405, 0
        %1428 = vmatprep.subr.mxu0 0.0
        %1429 = vmatpush1.msra.mxu0 %v1406
        %1430 = vmatprep.subr.mxu0 0.0
        %1431 = vmatpush1.msra.mxu0 %v1407
        %1432 = vmatprep.subr.mxu0 0.0
        %1433 = vmatpush1.msra.mxu0 %v1408
        %1434 = vmatprep.subr.mxu0 0.0
        %1435 = vmatpush1.msra.mxu0 %v1409
        %1436 = vmatprep.subr.mxu0 0.0
        %1437 = vmatpush1.msra.mxu0 %v1410
        %1438 = vmatprep.subr.mxu0 0.0
        %1439 = vmatpush1.msra.mxu0 %v1411
        %1440 = vmatprep.subr.mxu0 0.0
        %1441 = vmatpush1.msra.mxu0 %v1412
        %1442 = vmatprep.subr.mxu0 0.0
        %1443 = vmatpush1.msra.mxu0 %v1413
        %1444 = vmatprep.subr.mxu0 0.0
        %1445 = vmatpush1.msra.mxu0 0.0
        %1446 = vmatprep.subr.mxu0 0.0
        %1447 = vmatpush1.msra.mxu0 0.0
        %1448 = vmatprep.subr.mxu0 0.0
        %1449 = vmatpush1.msra.mxu0 0.0
        %1450 = vmatprep.subr.mxu0 0.0
        %1451 = vmatpush1.msra.mxu0 0.0
        %1452 = vmatprep.subr.mxu0 0.0
        %1453 = vmatpush1.msra.mxu0 0.0
        %1454 = vmatprep.subr.mxu0 0.0
        %1455 = vmatpush1.msra.mxu0 0.0
        %1456 = vmatprep.subr.mxu0 0.0
        %1457 = vmatpush1.msra.mxu0 0.0
        %1458 = vmatprep.subr.mxu0 0.0
        %1459 = vmatpush1.msra.mxu0 0.0
        %1460 = vmatprep.subr.mxu0 0.0
        %1461 = vmatpush1.msra.mxu0 0.0
        %1462 = vmatprep.subr.mxu0 0.0
        %1463 = vmatpush1.msra.mxu0 0.0
        %1464 = vmatprep.subr.mxu0 0.0
        %1465 = vmatpush1.msra.mxu0 0.0
        %1466 = vmatprep.subr.mxu0 0.0
        %1467 = vmatpush1.msra.mxu0 0.0
        %1468 = vmatprep.subr.mxu0 0.0
        %1469 = vmatpush1.msra.mxu0 0.0
        %1470 = vmatprep.subr.mxu0 0.0
        %1471 = vmatpush1.msra.mxu0 0.0
        %1472 = vmatprep.subr.mxu0 0.0
        %1473 = vmatpush1.msra.mxu0 0.0
        %1474 = vmatprep.subr.mxu0 0.0
        %1475 = vmatpush1.msra.mxu0 0.0
        %1476 = vmatprep.subr.mxu0 0.0
        %1477 = vmatpush1.msra.mxu0 0.0
        %1478 = vmatprep.subr.mxu0 0.0
        %1479 = vmatpush1.msra.mxu0 0.0
        %1480 = vmatprep.subr.mxu0 0.0
        %1481 = vmatpush1.msra.mxu0 0.0
        %1482 = vmatprep.subr.mxu0 0.0
        %1483 = vmatpush1.msra.mxu0 0.0
        %1484 = vmatprep.subr.mxu0 0.0
        %1485 = vmatpush1.msra.mxu0 0.0
        %1486 = vmatprep.subr.mxu0 0.0
        %1487 = vmatpush1.msra.mxu0 0.0
        %1488 = vmatprep.subr.mxu0 0.0
        %1489 = vmatpush1.msra.mxu0 0.0
        %1490 = vmatprep.subr.mxu0 0.0
        %1491 = vmatpush1.msra.mxu0 0.0
        %1492 = vmatprep.mubr.f32.mxu0 0.0
        %1493 = vmatmul.mubr.f32.gmra.mrb[0].mxu0 %v1423
        %v1494 = vpop.f32.mrb[0].mxu0
        %v1495 = vadd.f32 %v1419, %v1494
        %v1496 = vpop.f32.mrb[0].mxu0
        %1497 = vmatprep.mubr.f32.mxu0 0.0
        %1498 = vmatmul.mubr.f32.gmra.mrb[0].mxu0 %v1426
        %v1499 = vpop.f32.mrb[0].mxu0
        %v1500 = vadd.f32 %v1419, %v1499
        %v1501 = vpop.f32.mrb[0].mxu0
        %1502 = vdwg.mxu0
        %v1503 = vadd.f32 %v1310, %v1495
        %v1504 = vadd.f32 %v1311, %v1500
        %v1505 = vld [vmem:[%s507] sm:$0x1]
        %v1506 = vld [vmem:[%s510] sm:$0x1]
        %v1507 = vsel %vm526, %v1503, 0.0
        %1508 = vadd.xlane.f32.xlu0 %v1507
        %v1509 = vpop.xlane.xlu0 %1508
        %v1510 = vsel %vm526, %v1504, 0.0
        %1511 = vadd.xlane.f32.xlu0 %v1510
        %v1512 = vpop.xlane.xlu0 %1511
        %v1513 = vmul.f32 %v1509, %v1275
        %v1514 = vmul.f32 %v1512, %v1275
        %v1515 = vsub.f32 %v1503, %v1513
        %v1516 = vsub.f32 %v1504, %v1514
        %v1517 = vmul.f32 %v1515, %v1515
        %v1518 = vmul.f32 %v1516, %v1516
        %v1519 = vsel %vm526, %v1517, 0.0
        %1520 = vadd.xlane.f32.xlu0 %v1519
        %v1521 = vpop.xlane.xlu0 %1520
        %v1522 = vsel %vm526, %v1518, 0.0
        %1523 = vadd.xlane.f32.xlu0 %v1522
        %v1524 = vpop.xlane.xlu0 %1523
        %v1525 = vmul.f32 %v1521, %v1275
        %v1526 = vmul.f32 %v1524, %v1275
        %v1527 = vadd.f32 %v1525, 1e-05
        %v1528 = vadd.f32 %v1526, 1e-05
        %v1529 = vrsqrt.pop %v1527
        %v1530 = vrsqrt.pop %v1528
        %v1531 = vmul.f32 %v1515, %v1529
        %v1532 = vmul.f32 %v1516, %v1530
        %v1534 = vlaneseq
        %v1535 = vshrl.u32 %v1534, 7
        %v1536 = vsub.s32 0, %v1535
        %v1537 = vrot.slane %v1505, %v1536
        %v1539 = vmul.f32 %v1531, %v1537
        %v1540 = vmul.f32 %v1532, %v1537
        %v1542 = vlaneseq
        %v1543 = vshrl.u32 %v1542, 7
        %v1544 = vsub.s32 0, %v1543
        %v1545 = vrot.slane %v1506, %v1544
        %v1547 = vadd.f32 %v1539, %v1545
        %v1548 = vadd.f32 %v1540, %v1545
        %1549 = vst.msk [vmem:[#allocation2] sm:$0xff] %vm526, %v1547
        %1550 = vst.msk [vmem:[#allocation2 + $0x8] sm:$0xff] %vm526, %v1548
        %1551 = vst.msk [vmem:[#allocation6] sm:$0xff] %vm526, %v1547
        %1552 = vst.msk [vmem:[#allocation6 + $0x8] sm:$0xff] %vm526, %v1548
        // Predicated region
        $region73: #{tpu_custom_call.1} parent=63 // pred_check
          %p1553 = pneg %p313
        $region74: #{tpu_custom_call.1} parent=63 // pred_check_branch
          %1555 = sbr.rel (%p1553) target = $region76
        $region75: #{tpu_custom_call.1} parent=63 // pred_region
          %s1557 = ssub.s32 256, 256
          %1558 = vsyncadd [#allocation4], %s1557
          %s1559 = sshll.u32 [#allocation6], 4
          %s1560 = int_to_ptr.vmem [resolvable:$true] %s1559
          %1565 = dma.vmem_to_hbm [thread:$0]  %s1560, 256, %s11, [#allocation4], 128, 128, 8
        $region76: #{tpu_custom_call.1} parent=63 // pred_fallthru
          _
        // Predicated region
        $region77: #{tpu_custom_call.1} parent=63 // pred_check
          %p1566 = pneg %p313
        $region78: #{tpu_custom_call.1} parent=63 // pred_check_branch
          %1568 = sbr.rel (%p1566) target = $region80
        $region79: #{tpu_custom_call.1} parent=63 // pred_region
          %1569 = dma.done [#allocation4], 256
        $region80: #{tpu_custom_call.1} parent=63 // pred_fallthru
          _
      $region64: #{tpu_custom_call.1} parent=5 // pred_fallthru
        _
      %p1570 = scmp.le.s32.totalorder 2, %s19
      // Predicated region
      $region81: #{tpu_custom_call.1} parent=5 // pred_check
        %p1571 = pneg %p1570
      $region82: #{tpu_custom_call.1} parent=5 // pred_check_branch
        %1573 = sbr.rel (%p1571) target = $region84
      $region83: #{tpu_custom_call.1} parent=5 // pred_region
        %s1574 = ssub.s32 %s19, 2
      $region84: #{tpu_custom_call.1} parent=5 // pred_fallthru
        _
    $region6: #{tpu_custom_call.1} parent=1 // loop_footer
      %s23 = sadd.s32 1, %s19
    $region7: #{tpu_custom_call.1} parent=1 // loop_footer_branch
      %18 = sbr.rel target = $region3
    $region8: #{tpu_custom_call.1} parent=1 // loop_exit
      _
    %1575 = vsyncpa [#allocation4], 1
    %s1576 = scalar_lea.sflag [#allocation4], 1
    %1577 = vsyncpa %s1576, 1
    %1578 = vsyncpa [#allocation5], 1
    %s1579 = scalar_lea.sflag [#allocation5], 1
    %1580 = vsyncpa %s1579, 1

</llo_original>
